<compile_context>
chip_gen: v7x
topology: tpu7x:2x2x1
jax: 0.10.0
libtpu: 0.0.40
codegen_flags: <defaults>
</compile_context>

<pallas_src>
import jax
import jax.numpy as jnp
from jax import lax
from jax.experimental import pallas as pl
from jax.experimental.pallas import tpu as pltpu

# ----------------------------- synthetic config ------------------------------
BATCH = 2
IMG_C, IMG_H, IMG_W = 3, 16, 16
FEAT_IN = IMG_C * IMG_H * IMG_W       # 768
FEATURE_DIM = 32                      # src_model.output_dim
NUM_CLASSES = 8                       # src_model.num_classes
QUEUE_SIZE = 16                       # K (memory bank / moco queue size)
MOMENTUM = 0.999                      # moco momentum m
T_MOCO = 0.07
ALPHA, BETA, ETA = 1.0, 1.0, 1.0
STEPS = 1
# contrast_type='class_aware', ce_sup_type='weak_weak', refine_method starts as None


# ------------------------------ Pallas kernels -------------------------------
def _l2_normalize(x):
    # F.normalize(x, dim=1) with eps=1e-12 on the norm; rsqrt -> EUP slot.
    ss = jnp.sum(x * x, axis=1, keepdims=True)
    return x * lax.rsqrt(jnp.maximum(ss, 1e-24))


def _adapt_kernel(x_ref, wf_ref, bf_ref, wc_ref, bc_ref,
                  wfm_ref, bfm_ref, wcm_ref, bcm_ref,
                  memf_ref, memlab_ref, idxs_ref,
                  logits_q_ref, knorm_ref, pseudo_ref,
                  featsw2_ref, probsw2_ref, loss_ref,
                  wfm_out_ref, bfm_out_ref, wcm_out_ref, bcm_out_ref):
    """Fused AdaContrast step: src/mom forwards, EMA, MoCo logits, all losses."""
    b = BATCH
    inv_b = 1.0 / b
    x = x_ref[...]                                           # (3B, F_in): [w | q | k]

    # ---- source branch (one batched matmul pair over all stacked rows) ----
    wf = wf_ref[...]
    bf = bf_ref[...]
    wc = wc_ref[...]
    bc = bc_ref[...]
    feats_src = jnp.dot(x, wf, preferred_element_type=jnp.float32) + bf          # (3B, D)
    logits_src = jnp.dot(feats_src, wc, preferred_element_type=jnp.float32) + bc  # (3B, C)
    logits_w = logits_src[0:b]                               # weak-aug rows
    feats_q = feats_src[b:2 * b]                             # query rows
    logits_q = logits_src[b:2 * b]

    # ---- EMA momentum update of key encoder (consumed in-register below) ----
    m = MOMENTUM
    wfm = wfm_ref[...] * m + wf * (1.0 - m)
    bfm = bfm_ref[...] * m + bf * (1.0 - m)
    wcm = wcm_ref[...] * m + wc * (1.0 - m)
    bcm = bcm_ref[...] * m + bc * (1.0 - m)
    wfm_out_ref[...] = wfm
    bfm_out_ref[...] = bfm
    wcm_out_ref[...] = wcm
    bcm_out_ref[...] = bcm

    # ---- momentum branch (batched; uses post-EMA weights, as in MoCo) ----
    feats_mom = jnp.dot(x, wfm, preferred_element_type=jnp.float32) + bfm
    logits_mom = jnp.dot(feats_mom, wcm, preferred_element_type=jnp.float32) + bcm
    feats_k = feats_mom[2 * b:3 * b]                         # key rows
    feats_w2 = feats_mom[0:b]                                # weak rows (update_labels)
    logits_w2 = logits_mom[0:b]

    # ---- pseudo labels = argmax(softmax(logits_w)) = argmax(logits_w) ----
    mw = jnp.max(logits_w, axis=1, keepdims=True)
    col_c = lax.broadcasted_iota(jnp.int32, logits_w.shape, 1).astype(jnp.float32)
    pseudo_f = jnp.min(jnp.where(logits_w >= mw, col_c, float(NUM_CLASSES)),
                       axis=1, keepdims=True)                # (B,1) first-max index
    pseudo_ref[...] = pseudo_f.astype(jnp.int32)

    # ---- MoCo instance logits (kept in-register; no concat / no HBM write) ----
    qn = _l2_normalize(feats_q)
    kn = _l2_normalize(feats_k)
    knorm_ref[...] = kn
    inv_t = 1.0 / T_MOCO
    l_pos = jnp.sum(qn * kn, axis=1, keepdims=True) * inv_t                       # (B,1)
    l_neg = jnp.dot(qn, memf_ref[...], preferred_element_type=jnp.float32) * inv_t  # (B,K)

    # ---- mem_labels after this step's enqueue (class-aware mask uses them) ----
    col_k = lax.broadcasted_iota(jnp.int32, (b, QUEUE_SIZE), 1).astype(jnp.float32)
    idxs_f = idxs_ref[...].astype(jnp.float32)               # (B,1) replace positions
    match = col_k == idxs_f                                  # (B,K)
    repl_cnt = jnp.sum(jnp.where(match, 1.0, 0.0), axis=0, keepdims=True)        # (1,K)
    pseudo_at = jnp.sum(jnp.where(match, pseudo_f, 0.0), axis=0, keepdims=True)  # (1,K)
    memlab_f = memlab_ref[...].astype(jnp.float32)           # (1,K) old labels
    memlab_new = jnp.where(repl_cnt > 0.5, pseudo_at, memlab_f)

    # ---- loss_cls: F.cross_entropy(logits_w, pseudo_labels) (weak_weak) ----
    lse_w = mw + jnp.log(jnp.sum(jnp.exp(logits_w - mw), axis=1, keepdims=True))
    picked = jnp.sum(jnp.where(col_c == pseudo_f, logits_w, 0.0),
                     axis=1, keepdims=True)
    loss_cls = jnp.sum(lse_w - picked) * inv_b

    # ---- loss_ins: class-aware CE(logits_ins, 0); column 0 (positive) always kept ----
    keep = pseudo_f != memlab_new                            # (B,K)
    l_neg_m = jnp.where(keep, l_neg, -jnp.inf)
    m_row = jnp.maximum(l_pos, jnp.max(l_neg_m, axis=1, keepdims=True))
    sum_exp = jnp.exp(l_pos - m_row) + jnp.sum(jnp.exp(l_neg_m - m_row),
                                               axis=1, keepdims=True)
    lse_i = m_row + jnp.log(sum_exp)
    loss_ins = jnp.sum(lse_i - l_pos) * inv_b

    # ---- loss_div: sum(p_mean * log(p_mean + eps)) on logits_w ----
    p_w = jnp.exp(logits_w - lse_w)
    pm = jnp.sum(p_w, axis=0, keepdims=True) * inv_b
    loss_div = jnp.sum(pm * jnp.log(pm + 1e-8))

    loss_ref[0] = loss_cls
    loss_ref[1] = loss_ins
    loss_ref[2] = loss_div
    loss_ref[3] = ALPHA * loss_cls + BETA * loss_ins + ETA * loss_div

    # ---- outputs consumed by update_memory / update_labels glue ----
    logits_q_ref[...] = logits_q
    featsw2_ref[...] = feats_w2
    mw2 = jnp.max(logits_w2, axis=1, keepdims=True)
    lse_w2 = mw2 + jnp.log(jnp.sum(jnp.exp(logits_w2 - mw2), axis=1, keepdims=True))
    probsw2_ref[...] = jnp.exp(logits_w2 - lse_w2)           # softmax(logits_w2)


def _cls_kernel(x_ref, wf_ref, bf_ref, wc_ref, bc_ref, logits_ref):
    """cls_only forward: logits = (x @ Wf + bf) @ Wc + bc."""
    feats = jnp.dot(x_ref[...], wf_ref[...],
                    preferred_element_type=jnp.float32) + bf_ref[...]
    logits_ref[...] = jnp.dot(feats, wc_ref[...],
                              preferred_element_type=jnp.float32) + bc_ref[...]


# ------------------------------ kernel wrappers -------------------------------
_VMEM = pl.BlockSpec(memory_space=pltpu.MemorySpace.VMEM)
_SMEM = pl.BlockSpec(memory_space=pltpu.MemorySpace.SMEM)


@jax.jit
def _adapt_step(x_w, x_q, x_k, src_params, mom_params, mem_feat, mem_labels, idxs):
    """One fused forward_and_adapt step (single pallas_call + tiny scatters)."""
    b = x_w.shape[0]
    wf, bf, wc, bc = src_params
    wfm, bfm, wcm, bcm = mom_params
    x_all = jnp.concatenate([x_w, x_q, x_k], axis=0)         # (3B, F_in)

    out_shape = (
        jax.ShapeDtypeStruct((b, NUM_CLASSES), jnp.float32),   # logits_q
        jax.ShapeDtypeStruct((b, FEATURE_DIM), jnp.float32),   # k (normalized keys)
        jax.ShapeDtypeStruct((b, 1), jnp.int32),               # pseudo labels
        jax.ShapeDtypeStruct((b, FEATURE_DIM), jnp.float32),   # feats_w (mom branch)
        jax.ShapeDtypeStruct((b, NUM_CLASSES), jnp.float32),   # probs_w (mom branch)
        jax.ShapeDtypeStruct((4,), jnp.float32),               # [cls, ins, div, total]
        jax.ShapeDtypeStruct(wf.shape, jnp.float32),           # new mom wf
        jax.ShapeDtypeStruct(bf.shape, jnp.float32),           # new mom bf
        jax.ShapeDtypeStruct(wc.shape, jnp.float32),           # new mom wc
        jax.ShapeDtypeStruct(bc.shape, jnp.float32),           # new mom bc
    )
    out_specs = (_VMEM, _VMEM, _VMEM, _VMEM, _VMEM, _SMEM, _VMEM, _VMEM, _VMEM, _VMEM)
    in_specs = [_VMEM] * 12

    (logits_q, k_norm, pseudo, feats_w2, probs_w2, losses,
     nwf, nbf, nwc, nbc) = pl.pallas_call(
        _adapt_kernel,
        out_shape=out_shape,
        in_specs=in_specs,
        out_specs=out_specs,
    )(x_all, wf, bf, wc, bc, wfm, bfm, wcm, bcm,
      mem_feat, mem_labels.reshape(1, -1).astype(jnp.int32),
      idxs.reshape(b, 1).astype(jnp.int32))

    pseudo_flat = pseudo.reshape(-1)
    new_mem_feat = mem_feat.at[:, idxs].set(k_norm.T)        # update_memory (features)
    new_mem_labels = mem_labels.at[idxs].set(pseudo_flat)    # update_memory (labels)
    return (logits_q, losses, feats_w2, probs_w2,
            (nwf, nbf, nwc, nbc), new_mem_feat, new_mem_labels)


def cls_forward(images_nchw, params):
    """Eval-time cls_only forward on the test images -> logits."""
    b = images_nchw.shape[0]
    x_flat = images_nchw.reshape(b, -1)
    wf, bf, wc, bc = params
    return pl.pallas_call(
        _cls_kernel,
        out_shape=jax.ShapeDtypeStruct((b, NUM_CLASSES), jnp.float32),
    )(x_flat, wf, bf, wc, bc)


# ------------------------------ AdaContrast -----------------------------------
class AdaContrastPallas:
    def __init__(self, key_params, key_mem, key_lab):
        kf, kc = jax.random.split(key_params)
        wf = jax.random.normal(kf, (FEAT_IN, FEATURE_DIM), jnp.float32) * 0.02
        bf = jnp.zeros((1, FEATURE_DIM), jnp.float32)
        wc = jax.random.normal(kc, (FEATURE_DIM, NUM_CLASSES), jnp.float32) * 0.05
        bc = jnp.zeros((1, NUM_CLASSES), jnp.float32)
        self.src_params = (wf, bf, wc, bc)
        self.mom_params = tuple(self.src_params)             # deepcopy (arrays immutable)

        mem = jax.random.normal(key_mem, (FEATURE_DIM, QUEUE_SIZE), jnp.float32)
        self.mem_feat = mem / jnp.maximum(
            jnp.linalg.norm(mem, axis=0, keepdims=True), 1e-12)
        self.mem_labels = jax.random.randint(key_lab, (QUEUE_SIZE,), 0, NUM_CLASSES,
                                             dtype=jnp.int32)
        self.queue_ptr = 0

        self.banks_features = jnp.zeros((0, FEATURE_DIM), jnp.float32)
        self.banks_probs = jnp.zeros((0, NUM_CLASSES), jnp.float32)
        self.banks_ptr = 0
        self.first_X_samples = 0
        self.steps = STEPS
        self.last_losses = None

    # ---- AdaContrast.forward ----
    def forward(self, x):
        images_test, images_w, images_q, images_k = x
        for _ in range(self.steps):
            _ = self.forward_and_adapt(x)
        # model.eval(); cls_only forward on the test images -> logits
        return cls_forward(images_test, self.src_params)

    # ---- AdaContrast.forward_and_adapt (fused single Pallas kernel) ----
    def forward_and_adapt(self, x):
        _, images_w, images_q, images_k = x
        b = images_w.shape[0]
        x_w = images_w.reshape(b, -1)                        # NCHW -> (B, C*H*W)
        x_q = images_q.reshape(b, -1)
        x_k = images_k.reshape(b, -1)
        idxs = (self.queue_ptr + jnp.arange(b, dtype=jnp.int32)) % QUEUE_SIZE

        # refine_method stays None until first_X_samples >= 1024 -> argmax pseudo-labels
        # TODO(synk): nearest_neighbors pseudo-label refinement (active only after
        # first_X_samples >= 1024) is not implemented at these synthetic sizes.
        self.first_X_samples += int(b)

        (logits_q, losses, feats_w2, probs_w2, new_mom_params,
         new_mem_feat, new_mem_labels) = _adapt_step(
            x_w, x_q, x_k, self.src_params, self.mom_params,
            self.mem_feat, self.mem_labels, idxs)

        self.mom_params = new_mom_params                     # EMA'd key encoder
        self.mem_feat = new_mem_feat                         # update_memory
        self.mem_labels = new_mem_labels
        self.queue_ptr = int((self.queue_ptr + b) % QUEUE_SIZE)
        self.last_losses = losses                            # [cls, ins, div, total]

        # TODO(synk): torch autograd backward + optimizer.step() have no Pallas
        # equivalent (external torch optimizer with unknown hyperparameters);
        # the adaptation gradient update is omitted, src parameters stay fixed.

        # update_labels with the updated momentum model on images_w
        self.update_labels(feats_w2, probs_w2)
        return logits_q

    # ---- AdaContrast.update_labels ----
    def update_labels(self, features, probs):
        start = self.banks_ptr
        end = start + features.shape[0]
        if self.banks_features.shape[0] < QUEUE_SIZE:
            self.banks_features = jnp.concatenate([self.banks_features, features], 0)
            self.banks_probs = jnp.concatenate([self.banks_probs, probs], 0)
            self.banks_ptr = end % self.banks_features.shape[0]
        else:
            idxs = (start + jnp.arange(features.shape[0])) % self.banks_features.shape[0]
            self.banks_features = self.banks_features.at[idxs, :].set(features)
            self.banks_probs = self.banks_probs.at[idxs, :].set(probs)
            self.banks_ptr = end % self.banks_features.shape[0]


# ---------------------------------- main --------------------------------------
if __name__ == "__main__":
    key = jax.random.PRNGKey(0)
    k_img, k_param, k_mem, k_lab = jax.random.split(key, 4)
    kt, kw, kq, kk = jax.random.split(k_img, 4)
    shape = (BATCH, IMG_C, IMG_H, IMG_W)                     # NCHW, like PyTorch
    images_test = jax.random.normal(kt, shape, jnp.float32)
    images_w = jax.random.normal(kw, shape, jnp.float32)
    images_q = jax.random.normal(kq, shape, jnp.float32)
    images_k = jax.random.normal(kk, shape, jnp.float32)

    ada = AdaContrastPallas(k_param, k_mem, k_lab)
    out = ada.forward((images_test, images_w, images_q, images_k))
    out = jax.block_until_ready(out)
    losses = jax.block_until_ready(ada.last_losses)

    assert out.shape == (BATCH, NUM_CLASSES)
    assert losses.shape == (4,)
    assert bool(jnp.all(jnp.isfinite(out))) and bool(jnp.all(jnp.isfinite(losses)))
    print("KERNEL_OK")
</pallas_src>

<mosaic_0001>
module attributes {stable_mosaic.version = 11 : i64} {
  func.func @_adapt_kernel(%arg0: memref<6x768xf32, #tpu.memory_space<vmem>>, %arg1: memref<768x32xf32, #tpu.memory_space<vmem>>, %arg2: memref<1x32xf32, #tpu.memory_space<vmem>>, %arg3: memref<32x8xf32, #tpu.memory_space<vmem>>, %arg4: memref<1x8xf32, #tpu.memory_space<vmem>>, %arg5: memref<768x32xf32, #tpu.memory_space<vmem>>, %arg6: memref<1x32xf32, #tpu.memory_space<vmem>>, %arg7: memref<32x8xf32, #tpu.memory_space<vmem>>, %arg8: memref<1x8xf32, #tpu.memory_space<vmem>>, %arg9: memref<32x16xf32, #tpu.memory_space<vmem>>, %arg10: memref<1x16xi32, #tpu.memory_space<vmem>>, %arg11: memref<2x1xi32, #tpu.memory_space<vmem>>, %arg12: memref<2x8xf32, #tpu.memory_space<vmem>>, %arg13: memref<2x32xf32, #tpu.memory_space<vmem>>, %arg14: memref<2x1xi32, #tpu.memory_space<vmem>>, %arg15: memref<2x32xf32, #tpu.memory_space<vmem>>, %arg16: memref<2x8xf32, #tpu.memory_space<vmem>>, %arg17: memref<4xf32, #tpu.memory_space<smem>>, %arg18: memref<768x32xf32, #tpu.memory_space<vmem>>, %arg19: memref<1x32xf32, #tpu.memory_space<vmem>>, %arg20: memref<32x8xf32, #tpu.memory_space<vmem>>, %arg21: memref<1x8xf32, #tpu.memory_space<vmem>>) attributes {dimension_semantics = [], scalar_prefetch = 0 : i64, scratch_operands = 0 : i64, tpu.core_type = #tpu.core_type<tc>} {
    %c0 = arith.constant 0 : index
    %c0_0 = arith.constant 0 : index
    %0 = vector.load %arg0[%c0, %c0_0] : memref<6x768xf32, #tpu.memory_space<vmem>>, vector<6x768xf32>
    %c0_1 = arith.constant 0 : index
    %c0_2 = arith.constant 0 : index
    %1 = vector.load %arg1[%c0_1, %c0_2] : memref<768x32xf32, #tpu.memory_space<vmem>>, vector<768x32xf32>
    %c0_3 = arith.constant 0 : index
    %c0_4 = arith.constant 0 : index
    %2 = vector.load %arg2[%c0_3, %c0_4] : memref<1x32xf32, #tpu.memory_space<vmem>>, vector<1x32xf32>
    %c0_5 = arith.constant 0 : index
    %c0_6 = arith.constant 0 : index
    %3 = vector.load %arg3[%c0_5, %c0_6] : memref<32x8xf32, #tpu.memory_space<vmem>>, vector<32x8xf32>
    %c0_7 = arith.constant 0 : index
    %c0_8 = arith.constant 0 : index
    %4 = vector.load %arg4[%c0_7, %c0_8] : memref<1x8xf32, #tpu.memory_space<vmem>>, vector<1x8xf32>
    %cst = arith.constant dense<0.000000e+00> : vector<6x32xf32>
    %5 = tpu.matmul %0, %1, %cst {dimension_numbers = #tpu.dot_dimension_numbers<[1], [0], [0], [1], [0, 0, 1, 1], [], []>} : vector<6x768xf32>, vector<768x32xf32>, vector<6x32xf32> -> vector<6x32xf32>
    %6 = vector.broadcast %2 : vector<1x32xf32> to vector<6x32xf32>
    %7 = arith.addf %5, %6 : vector<6x32xf32>
    %cst_9 = arith.constant dense<0.000000e+00> : vector<6x8xf32>
    %8 = tpu.matmul %7, %3, %cst_9 {dimension_numbers = #tpu.dot_dimension_numbers<[1], [0], [0], [1], [0, 0, 1, 1], [], []>} : vector<6x32xf32>, vector<32x8xf32>, vector<6x8xf32> -> vector<6x8xf32>
    %9 = vector.broadcast %4 : vector<1x8xf32> to vector<6x8xf32>
    %10 = arith.addf %8, %9 : vector<6x8xf32>
    %11 = vector.extract_strided_slice %10 {offsets = [0, 0], sizes = [2, 8], strides = [1, 1]} : vector<6x8xf32> to vector<2x8xf32>
    %12 = vector.extract_strided_slice %7 {offsets = [2, 0], sizes = [2, 32], strides = [1, 1]} : vector<6x32xf32> to vector<2x32xf32>
    %13 = vector.extract_strided_slice %10 {offsets = [2, 0], sizes = [2, 8], strides = [1, 1]} : vector<6x8xf32> to vector<2x8xf32>
    %c0_10 = arith.constant 0 : index
    %c0_11 = arith.constant 0 : index
    %14 = vector.load %arg5[%c0_10, %c0_11] : memref<768x32xf32, #tpu.memory_space<vmem>>, vector<768x32xf32>
    %cst_12 = arith.constant 9.990000e-01 : f32
    %15 = vector.broadcast %cst_12 : f32 to vector<768x32xf32>
    %16 = arith.mulf %14, %15 : vector<768x32xf32>
    %cst_13 = arith.constant 1.000000e-03 : f32
    %17 = vector.broadcast %cst_13 : f32 to vector<768x32xf32>
    %18 = arith.mulf %1, %17 : vector<768x32xf32>
    %19 = arith.addf %16, %18 : vector<768x32xf32>
    %c0_14 = arith.constant 0 : index
    %c0_15 = arith.constant 0 : index
    %20 = vector.load %arg6[%c0_14, %c0_15] : memref<1x32xf32, #tpu.memory_space<vmem>>, vector<1x32xf32>
    %cst_16 = arith.constant 9.990000e-01 : f32
    %21 = vector.broadcast %cst_16 : f32 to vector<1x32xf32>
    %22 = arith.mulf %20, %21 : vector<1x32xf32>
    %cst_17 = arith.constant 1.000000e-03 : f32
    %23 = vector.broadcast %cst_17 : f32 to vector<1x32xf32>
    %24 = arith.mulf %2, %23 : vector<1x32xf32>
    %25 = arith.addf %22, %24 : vector<1x32xf32>
    %c0_18 = arith.constant 0 : index
    %c0_19 = arith.constant 0 : index
    %26 = vector.load %arg7[%c0_18, %c0_19] : memref<32x8xf32, #tpu.memory_space<vmem>>, vector<32x8xf32>
    %cst_20 = arith.constant 9.990000e-01 : f32
    %27 = vector.broadcast %cst_20 : f32 to vector<32x8xf32>
    %28 = arith.mulf %26, %27 : vector<32x8xf32>
    %cst_21 = arith.constant 1.000000e-03 : f32
    %29 = vector.broadcast %cst_21 : f32 to vector<32x8xf32>
    %30 = arith.mulf %3, %29 : vector<32x8xf32>
    %31 = arith.addf %28, %30 : vector<32x8xf32>
    %c0_22 = arith.constant 0 : index
    %c0_23 = arith.constant 0 : index
    %32 = vector.load %arg8[%c0_22, %c0_23] : memref<1x8xf32, #tpu.memory_space<vmem>>, vector<1x8xf32>
    %cst_24 = arith.constant 9.990000e-01 : f32
    %33 = vector.broadcast %cst_24 : f32 to vector<1x8xf32>
    %34 = arith.mulf %32, %33 : vector<1x8xf32>
    %cst_25 = arith.constant 1.000000e-03 : f32
    %35 = vector.broadcast %cst_25 : f32 to vector<1x8xf32>
    %36 = arith.mulf %4, %35 : vector<1x8xf32>
    %37 = arith.addf %34, %36 : vector<1x8xf32>
    %c0_26 = arith.constant 0 : index
    %c0_27 = arith.constant 0 : index
    %38 = vector.load %arg18[%c0_26, %c0_27] : memref<768x32xf32, #tpu.memory_space<vmem>>, vector<768x32xf32>
    tpu.vector_store %arg18[%c0_26, %c0_27], %19 {strides = array<i32>} : memref<768x32xf32, #tpu.memory_space<vmem>>, vector<768x32xf32>,
    %c0_28 = arith.constant 0 : index
    %c0_29 = arith.constant 0 : index
    %39 = vector.load %arg19[%c0_28, %c0_29] : memref<1x32xf32, #tpu.memory_space<vmem>>, vector<1x32xf32>
    tpu.vector_store %arg19[%c0_28, %c0_29], %25 {strides = array<i32>} : memref<1x32xf32, #tpu.memory_space<vmem>>, vector<1x32xf32>,
    %c0_30 = arith.constant 0 : index
    %c0_31 = arith.constant 0 : index
    %40 = vector.load %arg20[%c0_30, %c0_31] : memref<32x8xf32, #tpu.memory_space<vmem>>, vector<32x8xf32>
    tpu.vector_store %arg20[%c0_30, %c0_31], %31 {strides = array<i32>} : memref<32x8xf32, #tpu.memory_space<vmem>>, vector<32x8xf32>,
    %c0_32 = arith.constant 0 : index
    %c0_33 = arith.constant 0 : index
    %41 = vector.load %arg21[%c0_32, %c0_33] : memref<1x8xf32, #tpu.memory_space<vmem>>, vector<1x8xf32>
    tpu.vector_store %arg21[%c0_32, %c0_33], %37 {strides = array<i32>} : memref<1x8xf32, #tpu.memory_space<vmem>>, vector<1x8xf32>,
    %cst_34 = arith.constant dense<0.000000e+00> : vector<6x32xf32>
    %42 = tpu.matmul %0, %19, %cst_34 {dimension_numbers = #tpu.dot_dimension_numbers<[1], [0], [0], [1], [0, 0, 1, 1], [], []>} : vector<6x768xf32>, vector<768x32xf32>, vector<6x32xf32> -> vector<6x32xf32>
    %43 = vector.broadcast %25 : vector<1x32xf32> to vector<6x32xf32>
    %44 = arith.addf %42, %43 : vector<6x32xf32>
    %cst_35 = arith.constant dense<0.000000e+00> : vector<6x8xf32>
    %45 = tpu.matmul %44, %31, %cst_35 {dimension_numbers = #tpu.dot_dimension_numbers<[1], [0], [0], [1], [0, 0, 1, 1], [], []>} : vector<6x32xf32>, vector<32x8xf32>, vector<6x8xf32> -> vector<6x8xf32>
    %46 = vector.broadcast %37 : vector<1x8xf32> to vector<6x8xf32>
    %47 = arith.addf %45, %46 : vector<6x8xf32>
    %48 = vector.extract_strided_slice %44 {offsets = [4, 0], sizes = [2, 32], strides = [1, 1]} : vector<6x32xf32> to vector<2x32xf32>
    %49 = vector.extract_strided_slice %44 {offsets = [0, 0], sizes = [2, 32], strides = [1, 1]} : vector<6x32xf32> to vector<2x32xf32>
    %50 = vector.extract_strided_slice %47 {offsets = [0, 0], sizes = [2, 8], strides = [1, 1]} : vector<6x8xf32> to vector<2x8xf32>
    %cst_36 = arith.constant dense<0xFF800000> : vector<2xf32>
    %51 = vector.multi_reduction <maximumf>, %11, %cst_36 [1] : vector<2x8xf32> to vector<2xf32>
    %52 = vector.shape_cast %51 : vector<2xf32> to vector<2x1xf32>
    %53 = tpu.iota {dimensions = array<i32: 1>} : vector<2x8xi32>
    %54 = arith.sitofp %53 : vector<2x8xi32> to vector<2x8xf32>
    %55 = vector.broadcast %52 : vector<2x1xf32> to vector<2x8xf32>
    %56 = arith.cmpf oge, %11, %55 : vector<2x8xf32>
    %cst_37 = arith.constant 8.000000e+00 : f32
    %57 = vector.broadcast %cst_37 : f32 to vector<2x8xf32>
    %58 = arith.select %56, %54, %57 : vector<2x8xi1>, vector<2x8xf32>
    %cst_38 = arith.constant dense<0x7F800000> : vector<2xf32>
    %59 = vector.multi_reduction <minimumf>, %58, %cst_38 [1] : vector<2x8xf32> to vector<2xf32>
    %60 = vector.shape_cast %59 : vector<2xf32> to vector<2x1xf32>
    %61 = arith.fptosi %60 : vector<2x1xf32> to vector<2x1xi32>
    %c0_39 = arith.constant 0 : index
    %c0_40 = arith.constant 0 : index
    %62 = vector.load %arg14[%c0_39, %c0_40] : memref<2x1xi32, #tpu.memory_space<vmem>>, vector<2x1xi32>
    tpu.vector_store %arg14[%c0_39, %c0_40], %61 {strides = array<i32>} : memref<2x1xi32, #tpu.memory_space<vmem>>, vector<2x1xi32>,
    %63 = arith.mulf %12, %12 : vector<2x32xf32>
    %cst_41 = arith.constant dense<0.000000e+00> : vector<2xf32>
    %64 = vector.multi_reduction <add>, %63, %cst_41 [1] : vector<2x32xf32> to vector<2xf32>
    %65 = vector.shape_cast %64 : vector<2xf32> to vector<2x1xf32>
    %cst_42 = arith.constant 1.000000e-24 : f32
    %66 = vector.broadcast %cst_42 : f32 to vector<2x1xf32>
    %67 = arith.maximumf %65, %66 : vector<2x1xf32>
    %68 = math.rsqrt %67 : vector<2x1xf32>
    %69 = vector.broadcast %68 : vector<2x1xf32> to vector<2x32xf32>
    %70 = arith.mulf %12, %69 : vector<2x32xf32>
    %71 = arith.mulf %48, %48 : vector<2x32xf32>
    %cst_43 = arith.constant dense<0.000000e+00> : vector<2xf32>
    %72 = vector.multi_reduction <add>, %71, %cst_43 [1] : vector<2x32xf32> to vector<2xf32>
    %73 = vector.shape_cast %72 : vector<2xf32> to vector<2x1xf32>
    %cst_44 = arith.constant 1.000000e-24 : f32
    %74 = vector.broadcast %cst_44 : f32 to vector<2x1xf32>
    %75 = arith.maximumf %73, %74 : vector<2x1xf32>
    %76 = math.rsqrt %75 : vector<2x1xf32>
    %77 = vector.broadcast %76 : vector<2x1xf32> to vector<2x32xf32>
    %78 = arith.mulf %48, %77 : vector<2x32xf32>
    %c0_45 = arith.constant 0 : index
    %c0_46 = arith.constant 0 : index
    %79 = vector.load %arg13[%c0_45, %c0_46] : memref<2x32xf32, #tpu.memory_space<vmem>>, vector<2x32xf32>
    tpu.vector_store %arg13[%c0_45, %c0_46], %78 {strides = array<i32>} : memref<2x32xf32, #tpu.memory_space<vmem>>, vector<2x32xf32>,
    %80 = arith.mulf %70, %78 : vector<2x32xf32>
    %cst_47 = arith.constant dense<0.000000e+00> : vector<2xf32>
    %81 = vector.multi_reduction <add>, %80, %cst_47 [1] : vector<2x32xf32> to vector<2xf32>
    %82 = vector.shape_cast %81 : vector<2xf32> to vector<2x1xf32>
    %cst_48 = arith.constant 14.2857141 : f32
    %83 = vector.broadcast %cst_48 : f32 to vector<2x1xf32>
    %84 = arith.mulf %82, %83 : vector<2x1xf32>
    %c0_49 = arith.constant 0 : index
    %c0_50 = arith.constant 0 : index
    %85 = vector.load %arg9[%c0_49, %c0_50] : memref<32x16xf32, #tpu.memory_space<vmem>>, vector<32x16xf32>
    %cst_51 = arith.constant dense<0.000000e+00> : vector<2x16xf32>
    %86 = tpu.matmul %70, %85, %cst_51 {dimension_numbers = #tpu.dot_dimension_numbers<[1], [0], [0], [1], [0, 0, 1, 1], [], []>} : vector<2x32xf32>, vector<32x16xf32>, vector<2x16xf32> -> vector<2x16xf32>
    %cst_52 = arith.constant 14.2857141 : f32
    %87 = vector.broadcast %cst_52 : f32 to vector<2x16xf32>
    %88 = arith.mulf %86, %87 : vector<2x16xf32>
    %89 = tpu.iota {dimensions = array<i32: 1>} : vector<2x16xi32>
    %90 = arith.sitofp %89 : vector<2x16xi32> to vector<2x16xf32>
    %c0_53 = arith.constant 0 : index
    %c0_54 = arith.constant 0 : index
    %91 = vector.load %arg11[%c0_53, %c0_54] : memref<2x1xi32, #tpu.memory_space<vmem>>, vector<2x1xi32>
    %92 = arith.sitofp %91 : vector<2x1xi32> to vector<2x1xf32>
    %93 = vector.broadcast %92 : vector<2x1xf32> to vector<2x16xf32>
    %94 = arith.cmpf oeq, %90, %93 : vector<2x16xf32>
    %cst_55 = arith.constant 1.000000e+00 : f32
    %cst_56 = arith.constant 0.000000e+00 : f32
    %95 = vector.broadcast %cst_55 : f32 to vector<2x16xf32>
    %96 = vector.broadcast %cst_56 : f32 to vector<2x16xf32>
    %97 = arith.select %94, %95, %96 : vector<2x16xi1>, vector<2x16xf32>
    %cst_57 = arith.constant dense<0.000000e+00> : vector<16xf32>
    %98 = vector.multi_reduction <add>, %97, %cst_57 [0] : vector<2x16xf32> to vector<16xf32>
    %99 = vector.shape_cast %98 : vector<16xf32> to vector<1x16xf32>
    %cst_58 = arith.constant 0.000000e+00 : f32
    %100 = vector.shape_cast %60 : vector<2x1xf32> to vector<2x1xf32>
    %101 = vector.broadcast %100 : vector<2x1xf32> to vector<2x16xf32>
    %102 = vector.broadcast %cst_58 : f32 to vector<2x16xf32>
    %103 = arith.select %94, %101, %102 : vector<2x16xi1>, vector<2x16xf32>
    %cst_59 = arith.constant dense<0.000000e+00> : vector<16xf32>
    %104 = vector.multi_reduction <add>, %103, %cst_59 [0] : vector<2x16xf32> to vector<16xf32>
    %105 = vector.shape_cast %104 : vector<16xf32> to vector<1x16xf32>
    %c0_60 = arith.constant 0 : index
    %c0_61 = arith.constant 0 : index
    %106 = vector.load %arg10[%c0_60, %c0_61] : memref<1x16xi32, #tpu.memory_space<vmem>>, vector<1x16xi32>
    %107 = arith.sitofp %106 : vector<1x16xi32> to vector<1x16xf32>
    %cst_62 = arith.constant 5.000000e-01 : f32
    %108 = vector.broadcast %cst_62 : f32 to vector<1x16xf32>
    %109 = arith.cmpf ogt, %99, %108 : vector<1x16xf32>
    %110 = arith.select %109, %105, %107 : vector<1x16xi1>, vector<1x16xf32>
    %111 = vector.broadcast %52 : vector<2x1xf32> to vector<2x8xf32>
    %112 = arith.subf %11, %111 : vector<2x8xf32>
    %113 = math.exp %112 : vector<2x8xf32>
    %cst_63 = arith.constant dense<0.000000e+00> : vector<2xf32>
    %114 = vector.multi_reduction <add>, %113, %cst_63 [1] : vector<2x8xf32> to vector<2xf32>
    %115 = vector.shape_cast %114 : vector<2xf32> to vector<2x1xf32>
    %116 = math.log %115 : vector<2x1xf32>
    %117 = arith.addf %52, %116 : vector<2x1xf32>
    %118 = vector.broadcast %60 : vector<2x1xf32> to vector<2x8xf32>
    %119 = arith.cmpf oeq, %54, %118 : vector<2x8xf32>
    %cst_64 = arith.constant 0.000000e+00 : f32
    %120 = vector.broadcast %cst_64 : f32 to vector<2x8xf32>
    %121 = arith.select %119, %11, %120 : vector<2x8xi1>, vector<2x8xf32>
    %cst_65 = arith.constant dense<0.000000e+00> : vector<2xf32>
    %122 = vector.multi_reduction <add>, %121, %cst_65 [1] : vector<2x8xf32> to vector<2xf32>
    %123 = vector.shape_cast %122 : vector<2xf32> to vector<2x1xf32>
    %124 = arith.subf %117, %123 : vector<2x1xf32>
    %125 = vector.shape_cast %124 : vector<2x1xf32> to vector<1x2x1xf32>
    %cst_66 = arith.constant dense<0.000000e+00> : vector<1xf32>
    %126 = vector.multi_reduction <add>, %125, %cst_66 [1, 2] : vector<1x2x1xf32> to vector<1xf32>
    %127 = vector.shape_cast %126 : vector<1xf32> to vector<1x1x1xf32>
    %128 = vector.extract %127[0, 0, 0] : f32 from vector<1x1x1xf32>
    %cst_67 = arith.constant 5.000000e-01 : f32
    %129 = arith.mulf %128, %cst_67 : f32
    %130 = vector.broadcast %60 : vector<2x1xf32> to vector<2x16xf32>
    %131 = vector.broadcast %110 : vector<1x16xf32> to vector<2x16xf32>
    %132 = arith.cmpf one, %130, %131 : vector<2x16xf32>
    %cst_68 = arith.constant 0xFF800000 : f32
    %133 = vector.broadcast %cst_68 : f32 to vector<2x16xf32>
    %134 = arith.select %132, %88, %133 : vector<2x16xi1>, vector<2x16xf32>
    %cst_69 = arith.constant dense<0xFF800000> : vector<2xf32>
    %135 = vector.multi_reduction <maximumf>, %134, %cst_69 [1] : vector<2x16xf32> to vector<2xf32>
    %136 = vector.shape_cast %135 : vector<2xf32> to vector<2x1xf32>
    %137 = arith.maximumf %84, %136 : vector<2x1xf32>
    %138 = arith.subf %84, %137 : vector<2x1xf32>
    %139 = math.exp %138 : vector<2x1xf32>
    %140 = vector.broadcast %137 : vector<2x1xf32> to vector<2x16xf32>
    %141 = arith.subf %134, %140 : vector<2x16xf32>
    %142 = math.exp %141 : vector<2x16xf32>
    %cst_70 = arith.constant dense<0.000000e+00> : vector<2xf32>
    %143 = vector.multi_reduction <add>, %142, %cst_70 [1] : vector<2x16xf32> to vector<2xf32>
    %144 = vector.shape_cast %143 : vector<2xf32> to vector<2x1xf32>
    %145 = arith.addf %139, %144 : vector<2x1xf32>
    %146 = math.log %145 : vector<2x1xf32>
    %147 = arith.addf %137, %146 : vector<2x1xf32>
    %148 = arith.subf %147, %84 : vector<2x1xf32>
    %149 = vector.shape_cast %148 : vector<2x1xf32> to vector<1x2x1xf32>
    %cst_71 = arith.constant dense<0.000000e+00> : vector<1xf32>
    %150 = vector.multi_reduction <add>, %149, %cst_71 [1, 2] : vector<1x2x1xf32> to vector<1xf32>
    %151 = vector.shape_cast %150 : vector<1xf32> to vector<1x1x1xf32>
    %152 = vector.extract %151[0, 0, 0] : f32 from vector<1x1x1xf32>
    %cst_72 = arith.constant 5.000000e-01 : f32
    %153 = arith.mulf %152, %cst_72 : f32
    %154 = vector.broadcast %117 : vector<2x1xf32> to vector<2x8xf32>
    %155 = arith.subf %11, %154 : vector<2x8xf32>
    %156 = math.exp %155 : vector<2x8xf32>
    %cst_73 = arith.constant dense<0.000000e+00> : vector<8xf32>
    %157 = vector.multi_reduction <add>, %156, %cst_73 [0] : vector<2x8xf32> to vector<8xf32>
    %158 = vector.shape_cast %157 : vector<8xf32> to vector<1x8xf32>
    %cst_74 = arith.constant 5.000000e-01 : f32
    %159 = vector.broadcast %cst_74 : f32 to vector<1x8xf32>
    %160 = arith.mulf %158, %159 : vector<1x8xf32>
    %cst_75 = arith.constant 9.99999993E-9 : f32
    %161 = vector.broadcast %cst_75 : f32 to vector<1x8xf32>
    %162 = arith.addf %160, %161 : vector<1x8xf32>
    %163 = math.log %162 : vector<1x8xf32>
    %164 = arith.mulf %160, %163 : vector<1x8xf32>
    %165 = vector.shape_cast %164 : vector<1x8xf32> to vector<1x1x8xf32>
    %cst_76 = arith.constant dense<0.000000e+00> : vector<1xf32>
    %166 = vector.multi_reduction <add>, %165, %cst_76 [1, 2] : vector<1x1x8xf32> to vector<1xf32>
    %167 = vector.shape_cast %166 : vector<1xf32> to vector<1x1x1xf32>
    %168 = vector.extract %167[0, 0, 0] : f32 from vector<1x1x1xf32>
    %c0_77 = arith.constant 0 : index
    %169 = memref.load %arg17[%c0_77] : memref<4xf32, #tpu.memory_space<smem>>
    memref.store %129, %arg17[%c0_77] : memref<4xf32, #tpu.memory_space<smem>>
    %c1 = arith.constant 1 : index
    %170 = memref.load %arg17[%c1] : memref<4xf32, #tpu.memory_space<smem>>
    memref.store %153, %arg17[%c1] : memref<4xf32, #tpu.memory_space<smem>>
    %c2 = arith.constant 2 : index
    %171 = memref.load %arg17[%c2] : memref<4xf32, #tpu.memory_space<smem>>
    memref.store %168, %arg17[%c2] : memref<4xf32, #tpu.memory_space<smem>>
    %cst_78 = arith.constant 1.000000e+00 : f32
    %172 = arith.mulf %cst_78, %129 : f32
    %cst_79 = arith.constant 1.000000e+00 : f32
    %173 = arith.mulf %cst_79, %153 : f32
    %174 = arith.addf %172, %173 : f32
    %cst_80 = arith.constant 1.000000e+00 : f32
    %175 = arith.mulf %cst_80, %168 : f32
    %176 = arith.addf %174, %175 : f32
    %c3 = arith.constant 3 : index
    %177 = memref.load %arg17[%c3] : memref<4xf32, #tpu.memory_space<smem>>
    memref.store %176, %arg17[%c3] : memref<4xf32, #tpu.memory_space<smem>>
    %c0_81 = arith.constant 0 : index
    %c0_82 = arith.constant 0 : index
    %178 = vector.load %arg12[%c0_81, %c0_82] : memref<2x8xf32, #tpu.memory_space<vmem>>, vector<2x8xf32>
    tpu.vector_store %arg12[%c0_81, %c0_82], %13 {strides = array<i32>} : memref<2x8xf32, #tpu.memory_space<vmem>>, vector<2x8xf32>,
    %c0_83 = arith.constant 0 : index
    %c0_84 = arith.constant 0 : index
    %179 = vector.load %arg15[%c0_83, %c0_84] : memref<2x32xf32, #tpu.memory_space<vmem>>, vector<2x32xf32>
    tpu.vector_store %arg15[%c0_83, %c0_84], %49 {strides = array<i32>} : memref<2x32xf32, #tpu.memory_space<vmem>>, vector<2x32xf32>,
    %cst_85 = arith.constant dense<0xFF800000> : vector<2xf32>
    %180 = vector.multi_reduction <maximumf>, %50, %cst_85 [1] : vector<2x8xf32> to vector<2xf32>
    %181 = vector.shape_cast %180 : vector<2xf32> to vector<2x1xf32>
    %182 = vector.broadcast %181 : vector<2x1xf32> to vector<2x8xf32>
    %183 = arith.subf %50, %182 : vector<2x8xf32>
    %184 = math.exp %183 : vector<2x8xf32>
    %cst_86 = arith.constant dense<0.000000e+00> : vector<2xf32>
    %185 = vector.multi_reduction <add>, %184, %cst_86 [1] : vector<2x8xf32> to vector<2xf32>
    %186 = vector.shape_cast %185 : vector<2xf32> to vector<2x1xf32>
    %187 = math.log %186 : vector<2x1xf32>
    %188 = arith.addf %181, %187 : vector<2x1xf32>
    %189 = vector.broadcast %188 : vector<2x1xf32> to vector<2x8xf32>
    %190 = arith.subf %50, %189 : vector<2x8xf32>
    %191 = math.exp %190 : vector<2x8xf32>
    %c0_87 = arith.constant 0 : index
    %c0_88 = arith.constant 0 : index
    %192 = vector.load %arg16[%c0_87, %c0_88] : memref<2x8xf32, #tpu.memory_space<vmem>>, vector<2x8xf32>
    tpu.vector_store %arg16[%c0_87, %c0_88], %191 {strides = array<i32>} : memref<2x8xf32, #tpu.memory_space<vmem>>, vector<2x8xf32>,
    return
  }
}

</mosaic_0001>

<llo_original>
// kernel: _adapt_step.1
$region0: #{_adapt_step.1}
  #allocation0 [shape = 'u32[]', space=smem, size = 0x4, offset = 0x4, fixed_abs, tag = 'smem constant byte address 0x4 - core index']
  #allocation1 [shape = 'u32[144,128]{1,0:T(1,128)}', space=vmem, size = 0x12000, scoped, tag = 'internal scratch']
  %s0 = inlined_call_operand.vmem [shape: f32[6,768], index: 0, kind: input, shape index: {}]
  %s1 = inlined_call_operand.vmem [shape: f32[768,32], index: 1, kind: input, shape index: {}]
  %s2 = inlined_call_operand.vmem [shape: f32[1,32], index: 2, kind: input, shape index: {}]
  %s3 = inlined_call_operand.vmem [shape: f32[32,8], index: 3, kind: input, shape index: {}]
  %s4 = inlined_call_operand.vmem [shape: f32[1,8], index: 4, kind: input, shape index: {}]
  %s5 = inlined_call_operand.vmem [shape: f32[768,32], index: 5, kind: input, shape index: {}]
  %s6 = inlined_call_operand.vmem [shape: f32[1,32], index: 6, kind: input, shape index: {}]
  %s7 = inlined_call_operand.vmem [shape: f32[32,8], index: 7, kind: input, shape index: {}]
  %s8 = inlined_call_operand.vmem [shape: f32[1,8], index: 8, kind: input, shape index: {}]
  %s9 = inlined_call_operand.vmem [shape: f32[32,16], index: 9, kind: input, shape index: {}]
  %s10 = inlined_call_operand.vmem [shape: s32[1,16], index: 10, kind: input, shape index: {}]
  %s11 = inlined_call_operand.vmem [shape: s32[2,1], index: 11, kind: input, shape index: {}]
  %s12 = inlined_call_operand.hbm [shape: f32[2,8], index: 12, kind: output, shape index: {0}]
  %s13 = inlined_call_operand.vmem [shape: f32[2,32], index: 13, kind: output, shape index: {1}]
  %s14 = inlined_call_operand.vmem [shape: s32[2,1], index: 14, kind: output, shape index: {2}]
  %s15 = inlined_call_operand.hbm [shape: f32[2,32], index: 15, kind: output, shape index: {3}]
  %s16 = inlined_call_operand.hbm [shape: f32[2,8], index: 16, kind: output, shape index: {4}]
  %s17 = inlined_call_operand.hbm [shape: f32[4], index: 17, kind: output, shape index: {5}]
  %s18 = inlined_call_operand.vmem [shape: f32[768,32], index: 18, kind: output, shape index: {6}]
  %s19 = inlined_call_operand.hbm [shape: f32[1,32], index: 19, kind: output, shape index: {7}]
  %s20 = inlined_call_operand.vmem [shape: f32[32,8], index: 20, kind: output, shape index: {8}]
  %s21 = inlined_call_operand.hbm [shape: f32[1,8], index: 21, kind: output, shape index: {9}]
  %22 = xla_tuple %s12, %s13, %s14, %s15, %s16, %s17, %s18, %s19, %s20, %s21
  %s23 = sld [smem:[#allocation0]]
  $region130: #{_adapt_step.1} parent=0
    _
  %s25 = ssub.s32 1, %s23
  %s26 = scalar_select 0, %s25, %s23
  $region1: #{_adapt_step.1} parent=0
    #allocation2 [shape = 'u8[1024]{0}', space=vmem, size = 0x400, scoped, tag = 'output window, operand 0, single buffered']
    #allocation3 [shape = 's32[1]{0}', space=sflag, size = 0x4, scoped, tag = 'scoped memory for _adapt_step.1']
    #allocation4 [shape = 's32[1]{0}', space=sflag, size = 0x4, scoped, tag = 'scoped memory for _adapt_step.1']
    #allocation5 [shape = 'u8[1024]{0}', space=vmem, size = 0x400, scoped, tag = 'output window, operand 3, single buffered']
    #allocation6 [shape = 's32[1]{0}', space=sflag, size = 0x4, scoped, tag = 'scoped memory for _adapt_step.1']
    #allocation7 [shape = 'u8[1024]{0}', space=vmem, size = 0x400, scoped, tag = 'output window, operand 4, single buffered']
    #allocation8 [shape = 'u8[512]{0}', space=smem, size = 0x200, scoped, tag = 'output window, operand 5, single buffered']
    #allocation9 [shape = 'u8[512]{0}', space=vmem, size = 0x400, scoped, tag = 'output window, operand 7, single buffered']
    #allocation10 [shape = 's32[1]{0}', space=sflag, size = 0x4, scoped, tag = 'scoped memory for _adapt_step.1']
    #allocation11 [shape = 'u8[512]{0}', space=vmem, size = 0x400, scoped, tag = 'output window, operand 9, single buffered']
    %27 = vsyncpa [#allocation3], 0
    %28 = vsyncpa [#allocation6], 0
    %29 = vsyncpa [#allocation4], 0
    %30 = vsyncpa [#allocation10], 0
    // Predicated region
    $region2: #{_adapt_step.1} parent=1 // pred_check
      _
    $region3: #{_adapt_step.1} parent=1 // pred_check_branch
      %32 = sbr.rel (0) target = $region5
    $region4: #{_adapt_step.1} parent=1 // pred_region
      _
    $region5: #{_adapt_step.1} parent=1 // pred_fallthru
      _
    // Predicated region
    $region6: #{_adapt_step.1} parent=1 // pred_check
      _
    $region7: #{_adapt_step.1} parent=1 // pred_check_branch
      %34 = sbr.rel (0) target = $region9
    $region8: #{_adapt_step.1} parent=1 // pred_region
      _
    $region9: #{_adapt_step.1} parent=1 // pred_fallthru
      _
    // Predicated region
    $region10: #{_adapt_step.1} parent=1 // pred_check
      _
    $region11: #{_adapt_step.1} parent=1 // pred_check_branch
      %36 = sbr.rel (0) target = $region13
    $region12: #{_adapt_step.1} parent=1 // pred_region
      _
    $region13: #{_adapt_step.1} parent=1 // pred_fallthru
      _
    // Predicated region
    $region14: #{_adapt_step.1} parent=1 // pred_check
      _
    $region15: #{_adapt_step.1} parent=1 // pred_check_branch
      %38 = sbr.rel (0) target = $region17
    $region16: #{_adapt_step.1} parent=1 // pred_region
      _
    $region17: #{_adapt_step.1} parent=1 // pred_fallthru
      _
    // Predicated region
    $region18: #{_adapt_step.1} parent=1 // pred_check
      _
    $region19: #{_adapt_step.1} parent=1 // pred_check_branch
      %40 = sbr.rel (0) target = $region21
    $region20: #{_adapt_step.1} parent=1 // pred_region
      _
    $region21: #{_adapt_step.1} parent=1 // pred_fallthru
      _
    // Predicated region
    $region22: #{_adapt_step.1} parent=1 // pred_check
      _
    $region23: #{_adapt_step.1} parent=1 // pred_check_branch
      %42 = sbr.rel (0) target = $region25
    $region24: #{_adapt_step.1} parent=1 // pred_region
      _
    $region25: #{_adapt_step.1} parent=1 // pred_fallthru
      _
    // Predicated region
    $region26: #{_adapt_step.1} parent=1 // pred_check
      _
    $region27: #{_adapt_step.1} parent=1 // pred_check_branch
      %44 = sbr.rel (0) target = $region29
    $region28: #{_adapt_step.1} parent=1 // pred_region
      _
    $region29: #{_adapt_step.1} parent=1 // pred_fallthru
      _
    // Predicated region
    $region30: #{_adapt_step.1} parent=1 // pred_check
      _
    $region31: #{_adapt_step.1} parent=1 // pred_check_branch
      %46 = sbr.rel (0) target = $region33
    $region32: #{_adapt_step.1} parent=1 // pred_region
      _
    $region33: #{_adapt_step.1} parent=1 // pred_fallthru
      _
    // Predicated region
    $region34: #{_adapt_step.1} parent=1 // pred_check
      _
    $region35: #{_adapt_step.1} parent=1 // pred_check_branch
      %48 = sbr.rel (0) target = $region37
    $region36: #{_adapt_step.1} parent=1 // pred_region
      _
    $region37: #{_adapt_step.1} parent=1 // pred_fallthru
      _
    // Predicated region
    $region38: #{_adapt_step.1} parent=1 // pred_check
      _
    $region39: #{_adapt_step.1} parent=1 // pred_check_branch
      %50 = sbr.rel (0) target = $region41
    $region40: #{_adapt_step.1} parent=1 // pred_region
      _
    $region41: #{_adapt_step.1} parent=1 // pred_fallthru
      _
    // Predicated region
    $region42: #{_adapt_step.1} parent=1 // pred_check
      _
    $region43: #{_adapt_step.1} parent=1 // pred_check_branch
      %52 = sbr.rel (0) target = $region45
    $region44: #{_adapt_step.1} parent=1 // pred_region
      _
    $region45: #{_adapt_step.1} parent=1 // pred_fallthru
      _
    // Predicated region
    $region46: #{_adapt_step.1} parent=1 // pred_check
      _
    $region47: #{_adapt_step.1} parent=1 // pred_check_branch
      %54 = sbr.rel (0) target = $region49
    $region48: #{_adapt_step.1} parent=1 // pred_region
      _
    $region49: #{_adapt_step.1} parent=1 // pred_fallthru
      _
    %v55 = vld [vmem:[%s0] sm:$0x3f]
    %v56 = vld [vmem:[%s0 + $0x8] sm:$0x3f]
    %v57 = vld [vmem:[%s0 + $0x10] sm:$0x3f]
    %v58 = vld [vmem:[%s0 + $0x18] sm:$0x3f]
    %v59 = vld [vmem:[%s0 + $0x20] sm:$0x3f]
    %v60 = vld [vmem:[%s0 + $0x28] sm:$0x3f]
    %v61 = vld [vmem:[%s1] sm:$0xff]
    %v62 = vld [vmem:[%s1 + $0x8] sm:$0xff]
    %v63 = vld [vmem:[%s1 + $0x10] sm:$0xff]
    %v64 = vld [vmem:[%s1 + $0x18] sm:$0xff]
    %v65 = vld [vmem:[%s1 + $0x20] sm:$0xff]
    %v66 = vld [vmem:[%s1 + $0x28] sm:$0xff]
    %v67 = vld [vmem:[%s1 + $0x30] sm:$0xff]
    %v68 = vld [vmem:[%s1 + $0x38] sm:$0xff]
    %v69 = vld [vmem:[%s1 + $0x40] sm:$0xff]
    %v70 = vld [vmem:[%s1 + $0x48] sm:$0xff]
    %v71 = vld [vmem:[%s1 + $0x50] sm:$0xff]
    %v72 = vld [vmem:[%s1 + $0x58] sm:$0xff]
    %v73 = vld [vmem:[%s1 + $0x60] sm:$0xff]
    %v74 = vld [vmem:[%s1 + $0x68] sm:$0xff]
    %v75 = vld [vmem:[%s1 + $0x70] sm:$0xff]
    %v76 = vld [vmem:[%s1 + $0x78] sm:$0xff]
    %v77 = vld [vmem:[%s1 + $0x80] sm:$0xff]
    %v78 = vld [vmem:[%s1 + $0x88] sm:$0xff]
    %v79 = vld [vmem:[%s1 + $0x90] sm:$0xff]
    %v80 = vld [vmem:[%s1 + $0x98] sm:$0xff]
    %v81 = vld [vmem:[%s1 + $0xa0] sm:$0xff]
    %v82 = vld [vmem:[%s1 + $0xa8] sm:$0xff]
    %v83 = vld [vmem:[%s1 + $0xb0] sm:$0xff]
    %v84 = vld [vmem:[%s1 + $0xb8] sm:$0xff]
    %v85 = vld [vmem:[%s1 + $0xc0] sm:$0xff]
    %v86 = vld [vmem:[%s1 + $0xc8] sm:$0xff]
    %v87 = vld [vmem:[%s1 + $0xd0] sm:$0xff]
    %v88 = vld [vmem:[%s1 + $0xd8] sm:$0xff]
    %v89 = vld [vmem:[%s1 + $0xe0] sm:$0xff]
    %v90 = vld [vmem:[%s1 + $0xe8] sm:$0xff]
    %v91 = vld [vmem:[%s1 + $0xf0] sm:$0xff]
    %v92 = vld [vmem:[%s1 + $0xf8] sm:$0xff]
    %v93 = vld [vmem:[%s1 + $0x100] sm:$0xff]
    %v94 = vld [vmem:[%s1 + $0x108] sm:$0xff]
    %v95 = vld [vmem:[%s1 + $0x110] sm:$0xff]
    %v96 = vld [vmem:[%s1 + $0x118] sm:$0xff]
    %v97 = vld [vmem:[%s1 + $0x120] sm:$0xff]
    %v98 = vld [vmem:[%s1 + $0x128] sm:$0xff]
    %v99 = vld [vmem:[%s1 + $0x130] sm:$0xff]
    %v100 = vld [vmem:[%s1 + $0x138] sm:$0xff]
    %v101 = vld [vmem:[%s1 + $0x140] sm:$0xff]
    %v102 = vld [vmem:[%s1 + $0x148] sm:$0xff]
    %v103 = vld [vmem:[%s1 + $0x150] sm:$0xff]
    %v104 = vld [vmem:[%s1 + $0x158] sm:$0xff]
    %v105 = vld [vmem:[%s1 + $0x160] sm:$0xff]
    %v106 = vld [vmem:[%s1 + $0x168] sm:$0xff]
    %v107 = vld [vmem:[%s1 + $0x170] sm:$0xff]
    %v108 = vld [vmem:[%s1 + $0x178] sm:$0xff]
    %v109 = vld [vmem:[%s1 + $0x180] sm:$0xff]
    %v110 = vld [vmem:[%s1 + $0x188] sm:$0xff]
    %v111 = vld [vmem:[%s1 + $0x190] sm:$0xff]
    %v112 = vld [vmem:[%s1 + $0x198] sm:$0xff]
    %v113 = vld [vmem:[%s1 + $0x1a0] sm:$0xff]
    %v114 = vld [vmem:[%s1 + $0x1a8] sm:$0xff]
    %v115 = vld [vmem:[%s1 + $0x1b0] sm:$0xff]
    %v116 = vld [vmem:[%s1 + $0x1b8] sm:$0xff]
    %v117 = vld [vmem:[%s1 + $0x1c0] sm:$0xff]
    %v118 = vld [vmem:[%s1 + $0x1c8] sm:$0xff]
    %v119 = vld [vmem:[%s1 + $0x1d0] sm:$0xff]
    %v120 = vld [vmem:[%s1 + $0x1d8] sm:$0xff]
    %v121 = vld [vmem:[%s1 + $0x1e0] sm:$0xff]
    %v122 = vld [vmem:[%s1 + $0x1e8] sm:$0xff]
    %v123 = vld [vmem:[%s1 + $0x1f0] sm:$0xff]
    %v124 = vld [vmem:[%s1 + $0x1f8] sm:$0xff]
    %v125 = vld [vmem:[%s1 + $0x200] sm:$0xff]
    %v126 = vld [vmem:[%s1 + $0x208] sm:$0xff]
    %v127 = vld [vmem:[%s1 + $0x210] sm:$0xff]
    %v128 = vld [vmem:[%s1 + $0x218] sm:$0xff]
    %v129 = vld [vmem:[%s1 + $0x220] sm:$0xff]
    %v130 = vld [vmem:[%s1 + $0x228] sm:$0xff]
    %v131 = vld [vmem:[%s1 + $0x230] sm:$0xff]
    %v132 = vld [vmem:[%s1 + $0x238] sm:$0xff]
    %v133 = vld [vmem:[%s1 + $0x240] sm:$0xff]
    %v134 = vld [vmem:[%s1 + $0x248] sm:$0xff]
    %v135 = vld [vmem:[%s1 + $0x250] sm:$0xff]
    %v136 = vld [vmem:[%s1 + $0x258] sm:$0xff]
    %v137 = vld [vmem:[%s1 + $0x260] sm:$0xff]
    %v138 = vld [vmem:[%s1 + $0x268] sm:$0xff]
    %v139 = vld [vmem:[%s1 + $0x270] sm:$0xff]
    %v140 = vld [vmem:[%s1 + $0x278] sm:$0xff]
    %v141 = vld [vmem:[%s1 + $0x280] sm:$0xff]
    %v142 = vld [vmem:[%s1 + $0x288] sm:$0xff]
    %v143 = vld [vmem:[%s1 + $0x290] sm:$0xff]
    %v144 = vld [vmem:[%s1 + $0x298] sm:$0xff]
    %v145 = vld [vmem:[%s1 + $0x2a0] sm:$0xff]
    %v146 = vld [vmem:[%s1 + $0x2a8] sm:$0xff]
    %v147 = vld [vmem:[%s1 + $0x2b0] sm:$0xff]
    %v148 = vld [vmem:[%s1 + $0x2b8] sm:$0xff]
    %v149 = vld [vmem:[%s1 + $0x2c0] sm:$0xff]
    %v150 = vld [vmem:[%s1 + $0x2c8] sm:$0xff]
    %v151 = vld [vmem:[%s1 + $0x2d0] sm:$0xff]
    %v152 = vld [vmem:[%s1 + $0x2d8] sm:$0xff]
    %v153 = vld [vmem:[%s1 + $0x2e0] sm:$0xff]
    %v154 = vld [vmem:[%s1 + $0x2e8] sm:$0xff]
    %v155 = vld [vmem:[%s1 + $0x2f0] sm:$0xff]
    %v156 = vld [vmem:[%s1 + $0x2f8] sm:$0xff]
    %v157 = vld [vmem:[%s2] sm:$0x1]
    %v158 = vld [vmem:[%s3] sm:$0xff]
    %v159 = vld [vmem:[%s3 + $0x8] sm:$0xff]
    %v160 = vld [vmem:[%s3 + $0x10] sm:$0xff]
    %v161 = vld [vmem:[%s3 + $0x18] sm:$0xff]
    %v162 = vld [vmem:[%s4] sm:$0x1]
    %v164 = vlaneseq
    %v165 = vshrl.u32 %v164, 7
    %v166 = vsub.s32 0, %v165
    %v167 = vrot.slane %v157, %v166
    %169 = vmatprep.subr.mxu0 0.0
    %170 = vmatpush1.msra.mxu0 %v61
    %171 = vmatprep.subr.mxu0 0.0
    %172 = vmatpush1.msra.mxu0 %v62
    %173 = vmatprep.subr.mxu0 0.0
    %174 = vmatpush1.msra.mxu0 %v63
    %175 = vmatprep.subr.mxu0 0.0
    %176 = vmatpush1.msra.mxu0 %v64
    %177 = vmatprep.subr.mxu0 0.0
    %178 = vmatpush1.msra.mxu0 %v65
    %179 = vmatprep.subr.mxu0 0.0
    %180 = vmatpush1.msra.mxu0 %v66
    %181 = vmatprep.subr.mxu0 0.0
    %182 = vmatpush1.msra.mxu0 %v67
    %183 = vmatprep.subr.mxu0 0.0
    %184 = vmatpush1.msra.mxu0 %v68
    %185 = vmatprep.subr.mxu0 0.0
    %186 = vmatpush1.msra.mxu0 %v69
    %187 = vmatprep.subr.mxu0 0.0
    %188 = vmatpush1.msra.mxu0 %v70
    %189 = vmatprep.subr.mxu0 0.0
    %190 = vmatpush1.msra.mxu0 %v71
    %191 = vmatprep.subr.mxu0 0.0
    %192 = vmatpush1.msra.mxu0 %v72
    %193 = vmatprep.subr.mxu0 0.0
    %194 = vmatpush1.msra.mxu0 %v73
    %195 = vmatprep.subr.mxu0 0.0
    %196 = vmatpush1.msra.mxu0 %v74
    %197 = vmatprep.subr.mxu0 0.0
    %198 = vmatpush1.msra.mxu0 %v75
    %199 = vmatprep.subr.mxu0 0.0
    %200 = vmatpush1.msra.mxu0 %v76
    %201 = vmatprep.subr.mxu0 0.0
    %202 = vmatpush1.msra.mxu0 %v77
    %203 = vmatprep.subr.mxu0 0.0
    %204 = vmatpush1.msra.mxu0 %v78
    %205 = vmatprep.subr.mxu0 0.0
    %206 = vmatpush1.msra.mxu0 %v79
    %207 = vmatprep.subr.mxu0 0.0
    %208 = vmatpush1.msra.mxu0 %v80
    %209 = vmatprep.subr.mxu0 0.0
    %210 = vmatpush1.msra.mxu0 %v81
    %211 = vmatprep.subr.mxu0 0.0
    %212 = vmatpush1.msra.mxu0 %v82
    %213 = vmatprep.subr.mxu0 0.0
    %214 = vmatpush1.msra.mxu0 %v83
    %215 = vmatprep.subr.mxu0 0.0
    %216 = vmatpush1.msra.mxu0 %v84
    %217 = vmatprep.subr.mxu0 0.0
    %218 = vmatpush1.msra.mxu0 %v85
    %219 = vmatprep.subr.mxu0 0.0
    %220 = vmatpush1.msra.mxu0 %v86
    %221 = vmatprep.subr.mxu0 0.0
    %222 = vmatpush1.msra.mxu0 %v87
    %223 = vmatprep.subr.mxu0 0.0
    %224 = vmatpush1.msra.mxu0 %v88
    %225 = vmatprep.subr.mxu0 0.0
    %226 = vmatpush1.msra.mxu0 %v89
    %227 = vmatprep.subr.mxu0 0.0
    %228 = vmatpush1.msra.mxu0 %v90
    %229 = vmatprep.subr.mxu0 0.0
    %230 = vmatpush1.msra.mxu0 %v91
    %231 = vmatprep.subr.mxu0 0.0
    %232 = vmatpush1.msra.mxu0 %v92
    %233 = vmatprep.mubr.f32.mxu0 %v56
    %234 = vmatmul.mubr.f32.gmra.mrb[0].mxu0 %v55
    %v235 = vpop.f32.mrb[0].mxu0
    %v236 = vadd.f32 %v167, %v235
    %v237 = vpop.f32.mrb[0].mxu0
    %238 = vdwg.mxu0
    %239 = vmatprep.subr.mxu0 0.0
    %240 = vmatpush1.msra.mxu0 %v93
    %241 = vmatprep.subr.mxu0 0.0
    %242 = vmatpush1.msra.mxu0 %v94
    %243 = vmatprep.subr.mxu0 0.0
    %244 = vmatpush1.msra.mxu0 %v95
    %245 = vmatprep.subr.mxu0 0.0
    %246 = vmatpush1.msra.mxu0 %v96
    %247 = vmatprep.subr.mxu0 0.0
    %248 = vmatpush1.msra.mxu0 %v97
    %249 = vmatprep.subr.mxu0 0.0
    %250 = vmatpush1.msra.mxu0 %v98
    %251 = vmatprep.subr.mxu0 0.0
    %252 = vmatpush1.msra.mxu0 %v99
    %253 = vmatprep.subr.mxu0 0.0
    %254 = vmatpush1.msra.mxu0 %v100
    %255 = vmatprep.subr.mxu0 0.0
    %256 = vmatpush1.msra.mxu0 %v101
    %257 = vmatprep.subr.mxu0 0.0
    %258 = vmatpush1.msra.mxu0 %v102
    %259 = vmatprep.subr.mxu0 0.0
    %260 = vmatpush1.msra.mxu0 %v103
    %261 = vmatprep.subr.mxu0 0.0
    %262 = vmatpush1.msra.mxu0 %v104
    %263 = vmatprep.subr.mxu0 0.0
    %264 = vmatpush1.msra.mxu0 %v105
    %265 = vmatprep.subr.mxu0 0.0
    %266 = vmatpush1.msra.mxu0 %v106
    %267 = vmatprep.subr.mxu0 0.0
    %268 = vmatpush1.msra.mxu0 %v107
    %269 = vmatprep.subr.mxu0 0.0
    %270 = vmatpush1.msra.mxu0 %v108
    %271 = vmatprep.subr.mxu0 0.0
    %272 = vmatpush1.msra.mxu0 %v109
    %273 = vmatprep.subr.mxu0 0.0
    %274 = vmatpush1.msra.mxu0 %v110
    %275 = vmatprep.subr.mxu0 0.0
    %276 = vmatpush1.msra.mxu0 %v111
    %277 = vmatprep.subr.mxu0 0.0
    %278 = vmatpush1.msra.mxu0 %v112
    %279 = vmatprep.subr.mxu0 0.0
    %280 = vmatpush1.msra.mxu0 %v113
    %281 = vmatprep.subr.mxu0 0.0
    %282 = vmatpush1.msra.mxu0 %v114
    %283 = vmatprep.subr.mxu0 0.0
    %284 = vmatpush1.msra.mxu0 %v115
    %285 = vmatprep.subr.mxu0 0.0
    %286 = vmatpush1.msra.mxu0 %v116
    %287 = vmatprep.subr.mxu0 0.0
    %288 = vmatpush1.msra.mxu0 %v117
    %289 = vmatprep.subr.mxu0 0.0
    %290 = vmatpush1.msra.mxu0 %v118
    %291 = vmatprep.subr.mxu0 0.0
    %292 = vmatpush1.msra.mxu0 %v119
    %293 = vmatprep.subr.mxu0 0.0
    %294 = vmatpush1.msra.mxu0 %v120
    %295 = vmatprep.subr.mxu0 0.0
    %296 = vmatpush1.msra.mxu0 %v121
    %297 = vmatprep.subr.mxu0 0.0
    %298 = vmatpush1.msra.mxu0 %v122
    %299 = vmatprep.subr.mxu0 0.0
    %300 = vmatpush1.msra.mxu0 %v123
    %301 = vmatprep.subr.mxu0 0.0
    %302 = vmatpush1.msra.mxu0 %v124
    %303 = vmatprep.mubr.f32.mxu0 %v58
    %304 = vmatmul.mubr.f32.gmra.mrb[0].mxu0 %v57
    %v305 = vpop.f32.mrb[0].mxu0
    %v306 = vadd.f32 %v236, %v305
    %v307 = vpop.f32.mrb[0].mxu0
    %308 = vdwg.mxu0
    %309 = vmatprep.subr.mxu0 0.0
    %310 = vmatpush1.msra.mxu0 %v125
    %311 = vmatprep.subr.mxu0 0.0
    %312 = vmatpush1.msra.mxu0 %v126
    %313 = vmatprep.subr.mxu0 0.0
    %314 = vmatpush1.msra.mxu0 %v127
    %315 = vmatprep.subr.mxu0 0.0
    %316 = vmatpush1.msra.mxu0 %v128
    %317 = vmatprep.subr.mxu0 0.0
    %318 = vmatpush1.msra.mxu0 %v129
    %319 = vmatprep.subr.mxu0 0.0
    %320 = vmatpush1.msra.mxu0 %v130
    %321 = vmatprep.subr.mxu0 0.0
    %322 = vmatpush1.msra.mxu0 %v131
    %323 = vmatprep.subr.mxu0 0.0
    %324 = vmatpush1.msra.mxu0 %v132
    %325 = vmatprep.subr.mxu0 0.0
    %326 = vmatpush1.msra.mxu0 %v133
    %327 = vmatprep.subr.mxu0 0.0
    %328 = vmatpush1.msra.mxu0 %v134
    %329 = vmatprep.subr.mxu0 0.0
    %330 = vmatpush1.msra.mxu0 %v135
    %331 = vmatprep.subr.mxu0 0.0
    %332 = vmatpush1.msra.mxu0 %v136
    %333 = vmatprep.subr.mxu0 0.0
    %334 = vmatpush1.msra.mxu0 %v137
    %335 = vmatprep.subr.mxu0 0.0
    %336 = vmatpush1.msra.mxu0 %v138
    %337 = vmatprep.subr.mxu0 0.0
    %338 = vmatpush1.msra.mxu0 %v139
    %339 = vmatprep.subr.mxu0 0.0
    %340 = vmatpush1.msra.mxu0 %v140
    %341 = vmatprep.subr.mxu0 0.0
    %342 = vmatpush1.msra.mxu0 %v141
    %343 = vmatprep.subr.mxu0 0.0
    %344 = vmatpush1.msra.mxu0 %v142
    %345 = vmatprep.subr.mxu0 0.0
    %346 = vmatpush1.msra.mxu0 %v143
    %347 = vmatprep.subr.mxu0 0.0
    %348 = vmatpush1.msra.mxu0 %v144
    %349 = vmatprep.subr.mxu0 0.0
    %350 = vmatpush1.msra.mxu0 %v145
    %351 = vmatprep.subr.mxu0 0.0
    %352 = vmatpush1.msra.mxu0 %v146
    %353 = vmatprep.subr.mxu0 0.0
    %354 = vmatpush1.msra.mxu0 %v147
    %355 = vmatprep.subr.mxu0 0.0
    %356 = vmatpush1.msra.mxu0 %v148
    %357 = vmatprep.subr.mxu0 0.0
    %358 = vmatpush1.msra.mxu0 %v149
    %359 = vmatprep.subr.mxu0 0.0
    %360 = vmatpush1.msra.mxu0 %v150
    %361 = vmatprep.subr.mxu0 0.0
    %362 = vmatpush1.msra.mxu0 %v151
    %363 = vmatprep.subr.mxu0 0.0
    %364 = vmatpush1.msra.mxu0 %v152
    %365 = vmatprep.subr.mxu0 0.0
    %366 = vmatpush1.msra.mxu0 %v153
    %367 = vmatprep.subr.mxu0 0.0
    %368 = vmatpush1.msra.mxu0 %v154
    %369 = vmatprep.subr.mxu0 0.0
    %370 = vmatpush1.msra.mxu0 %v155
    %371 = vmatprep.subr.mxu0 0.0
    %372 = vmatpush1.msra.mxu0 %v156
    %373 = vmatprep.mubr.f32.mxu0 %v60
    %374 = vmatmul.mubr.f32.gmra.mrb[0].mxu0 %v59
    %v375 = vpop.f32.mrb[0].mxu0
    %v376 = vadd.f32 %v306, %v375
    %v377 = vpop.f32.mrb[0].mxu0
    %378 = vdwg.mxu0
    %v380 = vlaneseq
    %v381 = vshrl.u32 %v380, 7
    %v382 = vsub.s32 0, %v381
    %v383 = vrot.slane %v162, %v382
    %vm385 = vcmask 261120
    %v387 = vsel %vm385, %v376, 0
    %389 = vmatprep.subr.mxu0 0.0
    %390 = vmatpush1.msra.mxu0 %v158
    %391 = vmatprep.subr.mxu0 0.0
    %392 = vmatpush1.msra.mxu0 %v159
    %393 = vmatprep.subr.mxu0 0.0
    %394 = vmatpush1.msra.mxu0 %v160
    %395 = vmatprep.subr.mxu0 0.0
    %396 = vmatpush1.msra.mxu0 %v161
    %397 = vmatprep.subr.mxu0 0.0
    %398 = vmatpush1.msra.mxu0 0.0
    %399 = vmatprep.subr.mxu0 0.0
    %400 = vmatpush1.msra.mxu0 0.0
    %401 = vmatprep.subr.mxu0 0.0
    %402 = vmatpush1.msra.mxu0 0.0
    %403 = vmatprep.subr.mxu0 0.0
    %404 = vmatpush1.msra.mxu0 0.0
    %405 = vmatprep.subr.mxu0 0.0
    %406 = vmatpush1.msra.mxu0 0.0
    %407 = vmatprep.subr.mxu0 0.0
    %408 = vmatpush1.msra.mxu0 0.0
    %409 = vmatprep.subr.mxu0 0.0
    %410 = vmatpush1.msra.mxu0 0.0
    %411 = vmatprep.subr.mxu0 0.0
    %412 = vmatpush1.msra.mxu0 0.0
    %413 = vmatprep.subr.mxu0 0.0
    %414 = vmatpush1.msra.mxu0 0.0
    %415 = vmatprep.subr.mxu0 0.0
    %416 = vmatpush1.msra.mxu0 0.0
    %417 = vmatprep.subr.mxu0 0.0
    %418 = vmatpush1.msra.mxu0 0.0
    %419 = vmatprep.subr.mxu0 0.0
    %420 = vmatpush1.msra.mxu0 0.0
    %421 = vmatprep.subr.mxu0 0.0
    %422 = vmatpush1.msra.mxu0 0.0
    %423 = vmatprep.subr.mxu0 0.0
    %424 = vmatpush1.msra.mxu0 0.0
    %425 = vmatprep.subr.mxu0 0.0
    %426 = vmatpush1.msra.mxu0 0.0
    %427 = vmatprep.subr.mxu0 0.0
    %428 = vmatpush1.msra.mxu0 0.0
    %429 = vmatprep.subr.mxu0 0.0
    %430 = vmatpush1.msra.mxu0 0.0
    %431 = vmatprep.subr.mxu0 0.0
    %432 = vmatpush1.msra.mxu0 0.0
    %433 = vmatprep.subr.mxu0 0.0
    %434 = vmatpush1.msra.mxu0 0.0
    %435 = vmatprep.subr.mxu0 0.0
    %436 = vmatpush1.msra.mxu0 0.0
    %437 = vmatprep.subr.mxu0 0.0
    %438 = vmatpush1.msra.mxu0 0.0
    %439 = vmatprep.subr.mxu0 0.0
    %440 = vmatpush1.msra.mxu0 0.0
    %441 = vmatprep.subr.mxu0 0.0
    %442 = vmatpush1.msra.mxu0 0.0
    %443 = vmatprep.subr.mxu0 0.0
    %444 = vmatpush1.msra.mxu0 0.0
    %445 = vmatprep.subr.mxu0 0.0
    %446 = vmatpush1.msra.mxu0 0.0
    %447 = vmatprep.subr.mxu0 0.0
    %448 = vmatpush1.msra.mxu0 0.0
    %449 = vmatprep.subr.mxu0 0.0
    %450 = vmatpush1.msra.mxu0 0.0
    %451 = vmatprep.subr.mxu0 0.0
    %452 = vmatpush1.msra.mxu0 0.0
    %453 = vmatprep.mubr.f32.mxu0 0.0
    %454 = vmatmul.mubr.f32.gmra.mrb[0].mxu0 %v387
    %v455 = vpop.f32.mrb[0].mxu0
    %v456 = vadd.f32 %v383, %v455
    %v457 = vpop.f32.mrb[0].mxu0
    %458 = vdwg.mxu0
    %v459 = vld [vmem:[%s5] sm:$0xff]
    %v460 = vld [vmem:[%s5 + $0x8] sm:$0xff]
    %v461 = vld [vmem:[%s5 + $0x10] sm:$0xff]
    %v462 = vld [vmem:[%s5 + $0x18] sm:$0xff]
    %v463 = vld [vmem:[%s5 + $0x20] sm:$0xff]
    %v464 = vld [vmem:[%s5 + $0x28] sm:$0xff]
    %v465 = vld [vmem:[%s5 + $0x30] sm:$0xff]
    %v466 = vld [vmem:[%s5 + $0x38] sm:$0xff]
    %v467 = vld [vmem:[%s5 + $0x40] sm:$0xff]
    %v468 = vld [vmem:[%s5 + $0x48] sm:$0xff]
    %v469 = vld [vmem:[%s5 + $0x50] sm:$0xff]
    %v470 = vld [vmem:[%s5 + $0x58] sm:$0xff]
    %v471 = vld [vmem:[%s5 + $0x60] sm:$0xff]
    %v472 = vld [vmem:[%s5 + $0x68] sm:$0xff]
    %v473 = vld [vmem:[%s5 + $0x70] sm:$0xff]
    %v474 = vld [vmem:[%s5 + $0x78] sm:$0xff]
    %v475 = vld [vmem:[%s5 + $0x80] sm:$0xff]
    %v476 = vld [vmem:[%s5 + $0x88] sm:$0xff]
    %v477 = vld [vmem:[%s5 + $0x90] sm:$0xff]
    %v478 = vld [vmem:[%s5 + $0x98] sm:$0xff]
    %v479 = vld [vmem:[%s5 + $0xa0] sm:$0xff]
    %v480 = vld [vmem:[%s5 + $0xa8] sm:$0xff]
    %v481 = vld [vmem:[%s5 + $0xb0] sm:$0xff]
    %v482 = vld [vmem:[%s5 + $0xb8] sm:$0xff]
    %v483 = vld [vmem:[%s5 + $0xc0] sm:$0xff]
    %v484 = vld [vmem:[%s5 + $0xc8] sm:$0xff]
    %v485 = vld [vmem:[%s5 + $0xd0] sm:$0xff]
    %v486 = vld [vmem:[%s5 + $0xd8] sm:$0xff]
    %v487 = vld [vmem:[%s5 + $0xe0] sm:$0xff]
    %v488 = vld [vmem:[%s5 + $0xe8] sm:$0xff]
    %v489 = vld [vmem:[%s5 + $0xf0] sm:$0xff]
    %v490 = vld [vmem:[%s5 + $0xf8] sm:$0xff]
    %v491 = vld [vmem:[%s5 + $0x100] sm:$0xff]
    %v492 = vld [vmem:[%s5 + $0x108] sm:$0xff]
    %v493 = vld [vmem:[%s5 + $0x110] sm:$0xff]
    %v494 = vld [vmem:[%s5 + $0x118] sm:$0xff]
    %v495 = vld [vmem:[%s5 + $0x120] sm:$0xff]
    %v496 = vld [vmem:[%s5 + $0x128] sm:$0xff]
    %v497 = vld [vmem:[%s5 + $0x130] sm:$0xff]
    %v498 = vld [vmem:[%s5 + $0x138] sm:$0xff]
    %v499 = vld [vmem:[%s5 + $0x140] sm:$0xff]
    %v500 = vld [vmem:[%s5 + $0x148] sm:$0xff]
    %v501 = vld [vmem:[%s5 + $0x150] sm:$0xff]
    %v502 = vld [vmem:[%s5 + $0x158] sm:$0xff]
    %v503 = vld [vmem:[%s5 + $0x160] sm:$0xff]
    %v504 = vld [vmem:[%s5 + $0x168] sm:$0xff]
    %v505 = vld [vmem:[%s5 + $0x170] sm:$0xff]
    %v506 = vld [vmem:[%s5 + $0x178] sm:$0xff]
    %v507 = vld [vmem:[%s5 + $0x180] sm:$0xff]
    %v508 = vld [vmem:[%s5 + $0x188] sm:$0xff]
    %v509 = vld [vmem:[%s5 + $0x190] sm:$0xff]
    %v510 = vld [vmem:[%s5 + $0x198] sm:$0xff]
    %v511 = vld [vmem:[%s5 + $0x1a0] sm:$0xff]
    %v512 = vld [vmem:[%s5 + $0x1a8] sm:$0xff]
    %v513 = vld [vmem:[%s5 + $0x1b0] sm:$0xff]
    %v514 = vld [vmem:[%s5 + $0x1b8] sm:$0xff]
    %v515 = vld [vmem:[%s5 + $0x1c0] sm:$0xff]
    %v516 = vld [vmem:[%s5 + $0x1c8] sm:$0xff]
    %v517 = vld [vmem:[%s5 + $0x1d0] sm:$0xff]
    %v518 = vld [vmem:[%s5 + $0x1d8] sm:$0xff]
    %v519 = vld [vmem:[%s5 + $0x1e0] sm:$0xff]
    %v520 = vld [vmem:[%s5 + $0x1e8] sm:$0xff]
    %v521 = vld [vmem:[%s5 + $0x1f0] sm:$0xff]
    %v522 = vld [vmem:[%s5 + $0x1f8] sm:$0xff]
    %v523 = vld [vmem:[%s5 + $0x200] sm:$0xff]
    %v524 = vld [vmem:[%s5 + $0x208] sm:$0xff]
    %v525 = vld [vmem:[%s5 + $0x210] sm:$0xff]
    %v526 = vld [vmem:[%s5 + $0x218] sm:$0xff]
    %v527 = vld [vmem:[%s5 + $0x220] sm:$0xff]
    %v528 = vld [vmem:[%s5 + $0x228] sm:$0xff]
    %v529 = vld [vmem:[%s5 + $0x230] sm:$0xff]
    %v530 = vld [vmem:[%s5 + $0x238] sm:$0xff]
    %v531 = vld [vmem:[%s5 + $0x240] sm:$0xff]
    %v532 = vld [vmem:[%s5 + $0x248] sm:$0xff]
    %v533 = vld [vmem:[%s5 + $0x250] sm:$0xff]
    %v534 = vld [vmem:[%s5 + $0x258] sm:$0xff]
    %v535 = vld [vmem:[%s5 + $0x260] sm:$0xff]
    %v536 = vld [vmem:[%s5 + $0x268] sm:$0xff]
    %v537 = vld [vmem:[%s5 + $0x270] sm:$0xff]
    %v538 = vld [vmem:[%s5 + $0x278] sm:$0xff]
    %v539 = vld [vmem:[%s5 + $0x280] sm:$0xff]
    %v540 = vld [vmem:[%s5 + $0x288] sm:$0xff]
    %v541 = vld [vmem:[%s5 + $0x290] sm:$0xff]
    %v542 = vld [vmem:[%s5 + $0x298] sm:$0xff]
    %v543 = vld [vmem:[%s5 + $0x2a0] sm:$0xff]
    %v544 = vld [vmem:[%s5 + $0x2a8] sm:$0xff]
    %v545 = vld [vmem:[%s5 + $0x2b0] sm:$0xff]
    %v546 = vld [vmem:[%s5 + $0x2b8] sm:$0xff]
    %v547 = vld [vmem:[%s5 + $0x2c0] sm:$0xff]
    %v548 = vld [vmem:[%s5 + $0x2c8] sm:$0xff]
    %v549 = vld [vmem:[%s5 + $0x2d0] sm:$0xff]
    %v550 = vld [vmem:[%s5 + $0x2d8] sm:$0xff]
    %v551 = vld [vmem:[%s5 + $0x2e0] sm:$0xff]
    %v552 = vld [vmem:[%s5 + $0x2e8] sm:$0xff]
    %v553 = vld [vmem:[%s5 + $0x2f0] sm:$0xff]
    %v554 = vld [vmem:[%s5 + $0x2f8] sm:$0xff]
    %v555 = vmul.f32 %v459, 0.999
    %v556 = vmul.f32 %v460, 0.999
    %v557 = vmul.f32 %v461, 0.999
    %v558 = vmul.f32 %v462, 0.999
    %v559 = vmul.f32 %v463, 0.999
    %v560 = vmul.f32 %v464, 0.999
    %v561 = vmul.f32 %v465, 0.999
    %v562 = vmul.f32 %v466, 0.999
    %v563 = vmul.f32 %v467, 0.999
    %v564 = vmul.f32 %v468, 0.999
    %v565 = vmul.f32 %v469, 0.999
    %v566 = vmul.f32 %v470, 0.999
    %v567 = vmul.f32 %v471, 0.999
    %v568 = vmul.f32 %v472, 0.999
    %v569 = vmul.f32 %v473, 0.999
    %v570 = vmul.f32 %v474, 0.999
    %v571 = vmul.f32 %v475, 0.999
    %v572 = vmul.f32 %v476, 0.999
    %v573 = vmul.f32 %v477, 0.999
    %v574 = vmul.f32 %v478, 0.999
    %v575 = vmul.f32 %v479, 0.999
    %v576 = vmul.f32 %v480, 0.999
    %v577 = vmul.f32 %v481, 0.999
    %v578 = vmul.f32 %v482, 0.999
    %v579 = vmul.f32 %v483, 0.999
    %v580 = vmul.f32 %v484, 0.999
    %v581 = vmul.f32 %v485, 0.999
    %v582 = vmul.f32 %v486, 0.999
    %v583 = vmul.f32 %v487, 0.999
    %v584 = vmul.f32 %v488, 0.999
    %v585 = vmul.f32 %v489, 0.999
    %v586 = vmul.f32 %v490, 0.999
    %v587 = vmul.f32 %v491, 0.999
    %v588 = vmul.f32 %v492, 0.999
    %v589 = vmul.f32 %v493, 0.999
    %v590 = vmul.f32 %v494, 0.999
    %v591 = vmul.f32 %v495, 0.999
    %v592 = vmul.f32 %v496, 0.999
    %v593 = vmul.f32 %v497, 0.999
    %v594 = vmul.f32 %v498, 0.999
    %v595 = vmul.f32 %v499, 0.999
    %v596 = vmul.f32 %v500, 0.999
    %v597 = vmul.f32 %v501, 0.999
    %v598 = vmul.f32 %v502, 0.999
    %v599 = vmul.f32 %v503, 0.999
    %v600 = vmul.f32 %v504, 0.999
    %v601 = vmul.f32 %v505, 0.999
    %v602 = vmul.f32 %v506, 0.999
    %v603 = vmul.f32 %v507, 0.999
    %v604 = vmul.f32 %v508, 0.999
    %v605 = vmul.f32 %v509, 0.999
    %v606 = vmul.f32 %v510, 0.999
    %v607 = vmul.f32 %v511, 0.999
    %v608 = vmul.f32 %v512, 0.999
    %v609 = vmul.f32 %v513, 0.999
    %v610 = vmul.f32 %v514, 0.999
    %v611 = vmul.f32 %v515, 0.999
    %v612 = vmul.f32 %v516, 0.999
    %v613 = vmul.f32 %v517, 0.999
    %v614 = vmul.f32 %v518, 0.999
    %v615 = vmul.f32 %v519, 0.999
    %v616 = vmul.f32 %v520, 0.999
    %v617 = vmul.f32 %v521, 0.999
    %v618 = vmul.f32 %v522, 0.999
    %v619 = vmul.f32 %v523, 0.999
    %v620 = vmul.f32 %v524, 0.999
    %v621 = vmul.f32 %v525, 0.999
    %v622 = vmul.f32 %v526, 0.999
    %v623 = vmul.f32 %v527, 0.999
    %v624 = vmul.f32 %v528, 0.999
    %v625 = vmul.f32 %v529, 0.999
    %v626 = vmul.f32 %v530, 0.999
    %v627 = vmul.f32 %v531, 0.999
    %v628 = vmul.f32 %v532, 0.999
    %v629 = vmul.f32 %v533, 0.999
    %v630 = vmul.f32 %v534, 0.999
    %v631 = vmul.f32 %v535, 0.999
    %v632 = vmul.f32 %v536, 0.999
    %v633 = vmul.f32 %v537, 0.999
    %v634 = vmul.f32 %v538, 0.999
    %v635 = vmul.f32 %v539, 0.999
    %v636 = vmul.f32 %v540, 0.999
    %v637 = vmul.f32 %v541, 0.999
    %v638 = vmul.f32 %v542, 0.999
    %v639 = vmul.f32 %v543, 0.999
    %v640 = vmul.f32 %v544, 0.999
    %v641 = vmul.f32 %v545, 0.999
    %v642 = vmul.f32 %v546, 0.999
    %v643 = vmul.f32 %v547, 0.999
    %v644 = vmul.f32 %v548, 0.999
    %v645 = vmul.f32 %v549, 0.999
    %v646 = vmul.f32 %v550, 0.999
    %v647 = vmul.f32 %v551, 0.999
    %v648 = vmul.f32 %v552, 0.999
    %v649 = vmul.f32 %v553, 0.999
    %v650 = vmul.f32 %v554, 0.999
    %v651 = vmul.f32 %v61, 0.001
    %v652 = vmul.f32 %v62, 0.001
    %v653 = vmul.f32 %v63, 0.001
    %v654 = vmul.f32 %v64, 0.001
    %v655 = vmul.f32 %v65, 0.001
    %v656 = vmul.f32 %v66, 0.001
    %v657 = vmul.f32 %v67, 0.001
    %v658 = vmul.f32 %v68, 0.001
    %v659 = vmul.f32 %v69, 0.001
    %v660 = vmul.f32 %v70, 0.001
    %v661 = vmul.f32 %v71, 0.001
    %v662 = vmul.f32 %v72, 0.001
    %v663 = vmul.f32 %v73, 0.001
    %v664 = vmul.f32 %v74, 0.001
    %v665 = vmul.f32 %v75, 0.001
    %v666 = vmul.f32 %v76, 0.001
    %v667 = vmul.f32 %v77, 0.001
    %v668 = vmul.f32 %v78, 0.001
    %v669 = vmul.f32 %v79, 0.001
    %v670 = vmul.f32 %v80, 0.001
    %v671 = vmul.f32 %v81, 0.001
    %v672 = vmul.f32 %v82, 0.001
    %v673 = vmul.f32 %v83, 0.001
    %v674 = vmul.f32 %v84, 0.001
    %v675 = vmul.f32 %v85, 0.001
    %v676 = vmul.f32 %v86, 0.001
    %v677 = vmul.f32 %v87, 0.001
    %v678 = vmul.f32 %v88, 0.001
    %v679 = vmul.f32 %v89, 0.001
    %v680 = vmul.f32 %v90, 0.001
    %v681 = vmul.f32 %v91, 0.001
    %v682 = vmul.f32 %v92, 0.001
    %v683 = vmul.f32 %v93, 0.001
    %v684 = vmul.f32 %v94, 0.001
    %v685 = vmul.f32 %v95, 0.001
    %v686 = vmul.f32 %v96, 0.001
    %v687 = vmul.f32 %v97, 0.001
    %v688 = vmul.f32 %v98, 0.001
    %v689 = vmul.f32 %v99, 0.001
    %v690 = vmul.f32 %v100, 0.001
    %v691 = vmul.f32 %v101, 0.001
    %v692 = vmul.f32 %v102, 0.001
    %v693 = vmul.f32 %v103, 0.001
    %v694 = vmul.f32 %v104, 0.001
    %v695 = vmul.f32 %v105, 0.001
    %v696 = vmul.f32 %v106, 0.001
    %v697 = vmul.f32 %v107, 0.001
    %v698 = vmul.f32 %v108, 0.001
    %v699 = vmul.f32 %v109, 0.001
    %v700 = vmul.f32 %v110, 0.001
    %v701 = vmul.f32 %v111, 0.001
    %v702 = vmul.f32 %v112, 0.001
    %v703 = vmul.f32 %v113, 0.001
    %v704 = vmul.f32 %v114, 0.001
    %v705 = vmul.f32 %v115, 0.001
    %v706 = vmul.f32 %v116, 0.001
    %v707 = vmul.f32 %v117, 0.001
    %v708 = vmul.f32 %v118, 0.001
    %v709 = vmul.f32 %v119, 0.001
    %v710 = vmul.f32 %v120, 0.001
    %v711 = vmul.f32 %v121, 0.001
    %v712 = vmul.f32 %v122, 0.001
    %v713 = vmul.f32 %v123, 0.001
    %v714 = vmul.f32 %v124, 0.001
    %v715 = vmul.f32 %v125, 0.001
    %v716 = vmul.f32 %v126, 0.001
    %v717 = vmul.f32 %v127, 0.001
    %v718 = vmul.f32 %v128, 0.001
    %v719 = vmul.f32 %v129, 0.001
    %v720 = vmul.f32 %v130, 0.001
    %v721 = vmul.f32 %v131, 0.001
    %v722 = vmul.f32 %v132, 0.001
    %v723 = vmul.f32 %v133, 0.001
    %v724 = vmul.f32 %v134, 0.001
    %v725 = vmul.f32 %v135, 0.001
    %v726 = vmul.f32 %v136, 0.001
    %v727 = vmul.f32 %v137, 0.001
    %v728 = vmul.f32 %v138, 0.001
    %v729 = vmul.f32 %v139, 0.001
    %v730 = vmul.f32 %v140, 0.001
    %v731 = vmul.f32 %v141, 0.001
    %v732 = vmul.f32 %v142, 0.001
    %v733 = vmul.f32 %v143, 0.001
    %v734 = vmul.f32 %v144, 0.001
    %v735 = vmul.f32 %v145, 0.001
    %v736 = vmul.f32 %v146, 0.001
    %v737 = vmul.f32 %v147, 0.001
    %v738 = vmul.f32 %v148, 0.001
    %v739 = vmul.f32 %v149, 0.001
    %v740 = vmul.f32 %v150, 0.001
    %v741 = vmul.f32 %v151, 0.001
    %v742 = vmul.f32 %v152, 0.001
    %v743 = vmul.f32 %v153, 0.001
    %v744 = vmul.f32 %v154, 0.001
    %v745 = vmul.f32 %v155, 0.001
    %v746 = vmul.f32 %v156, 0.001
    %v747 = vadd.f32 %v555, %v651
    %v748 = vadd.f32 %v556, %v652
    %v749 = vadd.f32 %v557, %v653
    %v750 = vadd.f32 %v558, %v654
    %v751 = vadd.f32 %v559, %v655
    %v752 = vadd.f32 %v560, %v656
    %v753 = vadd.f32 %v561, %v657
    %v754 = vadd.f32 %v562, %v658
    %v755 = vadd.f32 %v563, %v659
    %v756 = vadd.f32 %v564, %v660
    %v757 = vadd.f32 %v565, %v661
    %v758 = vadd.f32 %v566, %v662
    %v759 = vadd.f32 %v567, %v663
    %v760 = vadd.f32 %v568, %v664
    %v761 = vadd.f32 %v569, %v665
    %v762 = vadd.f32 %v570, %v666
    %v763 = vadd.f32 %v571, %v667
    %v764 = vadd.f32 %v572, %v668
    %v765 = vadd.f32 %v573, %v669
    %v766 = vadd.f32 %v574, %v670
    %v767 = vadd.f32 %v575, %v671
    %v768 = vadd.f32 %v576, %v672
    %v769 = vadd.f32 %v577, %v673
    %v770 = vadd.f32 %v578, %v674
    %v771 = vadd.f32 %v579, %v675
    %v772 = vadd.f32 %v580, %v676
    %v773 = vadd.f32 %v581, %v677
    %v774 = vadd.f32 %v582, %v678
    %v775 = vadd.f32 %v583, %v679
    %v776 = vadd.f32 %v584, %v680
    %v777 = vadd.f32 %v585, %v681
    %v778 = vadd.f32 %v586, %v682
    %v779 = vadd.f32 %v587, %v683
    %v780 = vadd.f32 %v588, %v684
    %v781 = vadd.f32 %v589, %v685
    %v782 = vadd.f32 %v590, %v686
    %v783 = vadd.f32 %v591, %v687
    %v784 = vadd.f32 %v592, %v688
    %v785 = vadd.f32 %v593, %v689
    %v786 = vadd.f32 %v594, %v690
    %v787 = vadd.f32 %v595, %v691
    %v788 = vadd.f32 %v596, %v692
    %v789 = vadd.f32 %v597, %v693
    %v790 = vadd.f32 %v598, %v694
    %v791 = vadd.f32 %v599, %v695
    %v792 = vadd.f32 %v600, %v696
    %v793 = vadd.f32 %v601, %v697
    %v794 = vadd.f32 %v602, %v698
    %v795 = vadd.f32 %v603, %v699
    %v796 = vadd.f32 %v604, %v700
    %v797 = vadd.f32 %v605, %v701
    %v798 = vadd.f32 %v606, %v702
    %v799 = vadd.f32 %v607, %v703
    %v800 = vadd.f32 %v608, %v704
    %v801 = vadd.f32 %v609, %v705
    %v802 = vadd.f32 %v610, %v706
    %v803 = vadd.f32 %v611, %v707
    %v804 = vadd.f32 %v612, %v708
    %v805 = vadd.f32 %v613, %v709
    %v806 = vadd.f32 %v614, %v710
    %v807 = vadd.f32 %v615, %v711
    %v808 = vadd.f32 %v616, %v712
    %v809 = vadd.f32 %v617, %v713
    %v810 = vadd.f32 %v618, %v714
    %v811 = vadd.f32 %v619, %v715
    %v812 = vadd.f32 %v620, %v716
    %v813 = vadd.f32 %v621, %v717
    %v814 = vadd.f32 %v622, %v718
    %v815 = vadd.f32 %v623, %v719
    %v816 = vadd.f32 %v624, %v720
    %v817 = vadd.f32 %v625, %v721
    %v818 = vadd.f32 %v626, %v722
    %v819 = vadd.f32 %v627, %v723
    %v820 = vadd.f32 %v628, %v724
    %v821 = vadd.f32 %v629, %v725
    %v822 = vadd.f32 %v630, %v726
    %v823 = vadd.f32 %v631, %v727
    %v824 = vadd.f32 %v632, %v728
    %v825 = vadd.f32 %v633, %v729
    %v826 = vadd.f32 %v634, %v730
    %v827 = vadd.f32 %v635, %v731
    %v828 = vadd.f32 %v636, %v732
    %v829 = vadd.f32 %v637, %v733
    %v830 = vadd.f32 %v638, %v734
    %v831 = vadd.f32 %v639, %v735
    %v832 = vadd.f32 %v640, %v736
    %v833 = vadd.f32 %v641, %v737
    %v834 = vadd.f32 %v642, %v738
    %v835 = vadd.f32 %v643, %v739
    %v836 = vadd.f32 %v644, %v740
    %v837 = vadd.f32 %v645, %v741
    %v838 = vadd.f32 %v646, %v742
    %v839 = vadd.f32 %v647, %v743
    %v840 = vadd.f32 %v648, %v744
    %v841 = vadd.f32 %v649, %v745
    %v842 = vadd.f32 %v650, %v746
    %v843 = vld [vmem:[%s6] sm:$0x1]
    %v844 = vmul.f32 %v843, 0.999
    %v845 = vmul.f32 %v157, 0.001
    %v846 = vadd.f32 %v844, %v845
    %v847 = vld [vmem:[%s7] sm:$0xff]
    %v848 = vld [vmem:[%s7 + $0x8] sm:$0xff]
    %v849 = vld [vmem:[%s7 + $0x10] sm:$0xff]
    %v850 = vld [vmem:[%s7 + $0x18] sm:$0xff]
    %v851 = vmul.f32 %v847, 0.999
    %v852 = vmul.f32 %v848, 0.999
    %v853 = vmul.f32 %v849, 0.999
    %v854 = vmul.f32 %v850, 0.999
    %v855 = vmul.f32 %v158, 0.001
    %v856 = vmul.f32 %v159, 0.001
    %v857 = vmul.f32 %v160, 0.001
    %v858 = vmul.f32 %v161, 0.001
    %v859 = vadd.f32 %v851, %v855
    %v860 = vadd.f32 %v852, %v856
    %v861 = vadd.f32 %v853, %v857
    %v862 = vadd.f32 %v854, %v858
    %v863 = vld [vmem:[%s8] sm:$0x1]
    %v864 = vmul.f32 %v863, 0.999
    %v865 = vmul.f32 %v162, 0.001
    %v866 = vadd.f32 %v864, %v865
    %867 = vst.msk [vmem:[%s18] sm:$0xff] %vm385, %v747
    %868 = vst.msk [vmem:[%s18 + $0x8] sm:$0xff] %vm385, %v748
    %869 = vst.msk [vmem:[%s18 + $0x10] sm:$0xff] %vm385, %v749
    %870 = vst.msk [vmem:[%s18 + $0x18] sm:$0xff] %vm385, %v750
    %871 = vst.msk [vmem:[%s18 + $0x20] sm:$0xff] %vm385, %v751
    %872 = vst.msk [vmem:[%s18 + $0x28] sm:$0xff] %vm385, %v752
    %873 = vst.msk [vmem:[%s18 + $0x30] sm:$0xff] %vm385, %v753
    %874 = vst.msk [vmem:[%s18 + $0x38] sm:$0xff] %vm385, %v754
    %875 = vst.msk [vmem:[%s18 + $0x40] sm:$0xff] %vm385, %v755
    %876 = vst.msk [vmem:[%s18 + $0x48] sm:$0xff] %vm385, %v756
    %877 = vst.msk [vmem:[%s18 + $0x50] sm:$0xff] %vm385, %v757
    %878 = vst.msk [vmem:[%s18 + $0x58] sm:$0xff] %vm385, %v758
    %879 = vst.msk [vmem:[%s18 + $0x60] sm:$0xff] %vm385, %v759
    %880 = vst.msk [vmem:[%s18 + $0x68] sm:$0xff] %vm385, %v760
    %881 = vst.msk [vmem:[%s18 + $0x70] sm:$0xff] %vm385, %v761
    %882 = vst.msk [vmem:[%s18 + $0x78] sm:$0xff] %vm385, %v762
    %883 = vst.msk [vmem:[%s18 + $0x80] sm:$0xff] %vm385, %v763
    %884 = vst.msk [vmem:[%s18 + $0x88] sm:$0xff] %vm385, %v764
    %885 = vst.msk [vmem:[%s18 + $0x90] sm:$0xff] %vm385, %v765
    %886 = vst.msk [vmem:[%s18 + $0x98] sm:$0xff] %vm385, %v766
    %887 = vst.msk [vmem:[%s18 + $0xa0] sm:$0xff] %vm385, %v767
    %888 = vst.msk [vmem:[%s18 + $0xa8] sm:$0xff] %vm385, %v768
    %889 = vst.msk [vmem:[%s18 + $0xb0] sm:$0xff] %vm385, %v769
    %890 = vst.msk [vmem:[%s18 + $0xb8] sm:$0xff] %vm385, %v770
    %891 = vst.msk [vmem:[%s18 + $0xc0] sm:$0xff] %vm385, %v771
    %892 = vst.msk [vmem:[%s18 + $0xc8] sm:$0xff] %vm385, %v772
    %893 = vst.msk [vmem:[%s18 + $0xd0] sm:$0xff] %vm385, %v773
    %894 = vst.msk [vmem:[%s18 + $0xd8] sm:$0xff] %vm385, %v774
    %895 = vst.msk [vmem:[%s18 + $0xe0] sm:$0xff] %vm385, %v775
    %896 = vst.msk [vmem:[%s18 + $0xe8] sm:$0xff] %vm385, %v776
    %897 = vst.msk [vmem:[%s18 + $0xf0] sm:$0xff] %vm385, %v777
    %898 = vst.msk [vmem:[%s18 + $0xf8] sm:$0xff] %vm385, %v778
    %899 = vst.msk [vmem:[%s18 + $0x100] sm:$0xff] %vm385, %v779
    %900 = vst.msk [vmem:[%s18 + $0x108] sm:$0xff] %vm385, %v780
    %901 = vst.msk [vmem:[%s18 + $0x110] sm:$0xff] %vm385, %v781
    %902 = vst.msk [vmem:[%s18 + $0x118] sm:$0xff] %vm385, %v782
    %903 = vst.msk [vmem:[%s18 + $0x120] sm:$0xff] %vm385, %v783
    %904 = vst.msk [vmem:[%s18 + $0x128] sm:$0xff] %vm385, %v784
    %905 = vst.msk [vmem:[%s18 + $0x130] sm:$0xff] %vm385, %v785
    %906 = vst.msk [vmem:[%s18 + $0x138] sm:$0xff] %vm385, %v786
    %907 = vst.msk [vmem:[%s18 + $0x140] sm:$0xff] %vm385, %v787
    %908 = vst.msk [vmem:[%s18 + $0x148] sm:$0xff] %vm385, %v788
    %909 = vst.msk [vmem:[%s18 + $0x150] sm:$0xff] %vm385, %v789
    %910 = vst.msk [vmem:[%s18 + $0x158] sm:$0xff] %vm385, %v790
    %911 = vst.msk [vmem:[%s18 + $0x160] sm:$0xff] %vm385, %v791
    %912 = vst.msk [vmem:[%s18 + $0x168] sm:$0xff] %vm385, %v792
    %913 = vst.msk [vmem:[%s18 + $0x170] sm:$0xff] %vm385, %v793
    %914 = vst.msk [vmem:[%s18 + $0x178] sm:$0xff] %vm385, %v794
    %915 = vst.msk [vmem:[%s18 + $0x180] sm:$0xff] %vm385, %v795
    %916 = vst.msk [vmem:[%s18 + $0x188] sm:$0xff] %vm385, %v796
    %917 = vst.msk [vmem:[%s18 + $0x190] sm:$0xff] %vm385, %v797
    %918 = vst.msk [vmem:[%s18 + $0x198] sm:$0xff] %vm385, %v798
    %919 = vst.msk [vmem:[%s18 + $0x1a0] sm:$0xff] %vm385, %v799
    %920 = vst.msk [vmem:[%s18 + $0x1a8] sm:$0xff] %vm385, %v800
    %921 = vst.msk [vmem:[%s18 + $0x1b0] sm:$0xff] %vm385, %v801
    %922 = vst.msk [vmem:[%s18 + $0x1b8] sm:$0xff] %vm385, %v802
    %923 = vst.msk [vmem:[%s18 + $0x1c0] sm:$0xff] %vm385, %v803
    %924 = vst.msk [vmem:[%s18 + $0x1c8] sm:$0xff] %vm385, %v804
    %925 = vst.msk [vmem:[%s18 + $0x1d0] sm:$0xff] %vm385, %v805
    %926 = vst.msk [vmem:[%s18 + $0x1d8] sm:$0xff] %vm385, %v806
    %927 = vst.msk [vmem:[%s18 + $0x1e0] sm:$0xff] %vm385, %v807
    %928 = vst.msk [vmem:[%s18 + $0x1e8] sm:$0xff] %vm385, %v808
    %929 = vst.msk [vmem:[%s18 + $0x1f0] sm:$0xff] %vm385, %v809
    %930 = vst.msk [vmem:[%s18 + $0x1f8] sm:$0xff] %vm385, %v810
    %931 = vst.msk [vmem:[%s18 + $0x200] sm:$0xff] %vm385, %v811
    %932 = vst.msk [vmem:[%s18 + $0x208] sm:$0xff] %vm385, %v812
    %933 = vst.msk [vmem:[%s18 + $0x210] sm:$0xff] %vm385, %v813
    %934 = vst.msk [vmem:[%s18 + $0x218] sm:$0xff] %vm385, %v814
    %935 = vst.msk [vmem:[%s18 + $0x220] sm:$0xff] %vm385, %v815
    %936 = vst.msk [vmem:[%s18 + $0x228] sm:$0xff] %vm385, %v816
    %937 = vst.msk [vmem:[%s18 + $0x230] sm:$0xff] %vm385, %v817
    %938 = vst.msk [vmem:[%s18 + $0x238] sm:$0xff] %vm385, %v818
    %939 = vst.msk [vmem:[%s18 + $0x240] sm:$0xff] %vm385, %v819
    %940 = vst.msk [vmem:[%s18 + $0x248] sm:$0xff] %vm385, %v820
    %941 = vst.msk [vmem:[%s18 + $0x250] sm:$0xff] %vm385, %v821
    %942 = vst.msk [vmem:[%s18 + $0x258] sm:$0xff] %vm385, %v822
    %943 = vst.msk [vmem:[%s18 + $0x260] sm:$0xff] %vm385, %v823
    %944 = vst.msk [vmem:[%s18 + $0x268] sm:$0xff] %vm385, %v824
    %945 = vst.msk [vmem:[%s18 + $0x270] sm:$0xff] %vm385, %v825
    %946 = vst.msk [vmem:[%s18 + $0x278] sm:$0xff] %vm385, %v826
    %947 = vst.msk [vmem:[%s18 + $0x280] sm:$0xff] %vm385, %v827
    %948 = vst.msk [vmem:[%s18 + $0x288] sm:$0xff] %vm385, %v828
    %949 = vst.msk [vmem:[%s18 + $0x290] sm:$0xff] %vm385, %v829
    %950 = vst.msk [vmem:[%s18 + $0x298] sm:$0xff] %vm385, %v830
    %951 = vst.msk [vmem:[%s18 + $0x2a0] sm:$0xff] %vm385, %v831
    %952 = vst.msk [vmem:[%s18 + $0x2a8] sm:$0xff] %vm385, %v832
    %953 = vst.msk [vmem:[%s18 + $0x2b0] sm:$0xff] %vm385, %v833
    %954 = vst.msk [vmem:[%s18 + $0x2b8] sm:$0xff] %vm385, %v834
    %955 = vst.msk [vmem:[%s18 + $0x2c0] sm:$0xff] %vm385, %v835
    %956 = vst.msk [vmem:[%s18 + $0x2c8] sm:$0xff] %vm385, %v836
    %957 = vst.msk [vmem:[%s18 + $0x2d0] sm:$0xff] %vm385, %v837
    %958 = vst.msk [vmem:[%s18 + $0x2d8] sm:$0xff] %vm385, %v838
    %959 = vst.msk [vmem:[%s18 + $0x2e0] sm:$0xff] %vm385, %v839
    %960 = vst.msk [vmem:[%s18 + $0x2e8] sm:$0xff] %vm385, %v840
    %961 = vst.msk [vmem:[%s18 + $0x2f0] sm:$0xff] %vm385, %v841
    %962 = vst.msk [vmem:[%s18 + $0x2f8] sm:$0xff] %vm385, %v842
    %vm963 = vcmask 253952
    %964 = vst.msk [vmem:[#allocation9] sm:$0x1] %vm963, %v846
    %vm965 = vcmask 64512
    %966 = vst.msk [vmem:[%s20] sm:$0xff] %vm965, %v859
    %967 = vst.msk [vmem:[%s20 + $0x8] sm:$0xff] %vm965, %v860
    %968 = vst.msk [vmem:[%s20 + $0x10] sm:$0xff] %vm965, %v861
    %969 = vst.msk [vmem:[%s20 + $0x18] sm:$0xff] %vm965, %v862
    %vm970 = vcmask 57344
    %971 = vst.msk [vmem:[#allocation11] sm:$0x1] %vm970, %v866
    %v973 = vlaneseq
    %v974 = vshrl.u32 %v973, 7
    %v975 = vsub.s32 0, %v974
    %v976 = vrot.slane %v846, %v975
    %978 = vmatprep.subr.mxu0 0.0
    %979 = vmatpush1.msra.mxu0 %v747
    %980 = vmatprep.subr.mxu0 0.0
    %981 = vmatpush1.msra.mxu0 %v748
    %982 = vmatprep.subr.mxu0 0.0
    %983 = vmatpush1.msra.mxu0 %v749
    %984 = vmatprep.subr.mxu0 0.0
    %985 = vmatpush1.msra.mxu0 %v750
    %986 = vmatprep.subr.mxu0 0.0
    %987 = vmatpush1.msra.mxu0 %v751
    %988 = vmatprep.subr.mxu0 0.0
    %989 = vmatpush1.msra.mxu0 %v752
    %990 = vmatprep.subr.mxu0 0.0
    %991 = vmatpush1.msra.mxu0 %v753
    %992 = vmatprep.subr.mxu0 0.0
    %993 = vmatpush1.msra.mxu0 %v754
    %994 = vmatprep.subr.mxu0 0.0
    %995 = vmatpush1.msra.mxu0 %v755
    %996 = vmatprep.subr.mxu0 0.0
    %997 = vmatpush1.msra.mxu0 %v756
    %998 = vmatprep.subr.mxu0 0.0
    %999 = vmatpush1.msra.mxu0 %v757
    %1000 = vmatprep.subr.mxu0 0.0
    %1001 = vmatpush1.msra.mxu0 %v758
    %1002 = vmatprep.subr.mxu0 0.0
    %1003 = vmatpush1.msra.mxu0 %v759
    %1004 = vmatprep.subr.mxu0 0.0
    %1005 = vmatpush1.msra.mxu0 %v760
    %1006 = vmatprep.subr.mxu0 0.0
    %1007 = vmatpush1.msra.mxu0 %v761
    %1008 = vmatprep.subr.mxu0 0.0
    %1009 = vmatpush1.msra.mxu0 %v762
    %1010 = vmatprep.subr.mxu0 0.0
    %1011 = vmatpush1.msra.mxu0 %v763
    %1012 = vmatprep.subr.mxu0 0.0
    %1013 = vmatpush1.msra.mxu0 %v764
    %1014 = vmatprep.subr.mxu0 0.0
    %1015 = vmatpush1.msra.mxu0 %v765
    %1016 = vmatprep.subr.mxu0 0.0
    %1017 = vmatpush1.msra.mxu0 %v766
    %1018 = vmatprep.subr.mxu0 0.0
    %1019 = vmatpush1.msra.mxu0 %v767
    %1020 = vmatprep.subr.mxu0 0.0
    %1021 = vmatpush1.msra.mxu0 %v768
    %1022 = vmatprep.subr.mxu0 0.0
    %1023 = vmatpush1.msra.mxu0 %v769
    %1024 = vmatprep.subr.mxu0 0.0
    %1025 = vmatpush1.msra.mxu0 %v770
    %1026 = vmatprep.subr.mxu0 0.0
    %1027 = vmatpush1.msra.mxu0 %v771
    %1028 = vmatprep.subr.mxu0 0.0
    %1029 = vmatpush1.msra.mxu0 %v772
    %1030 = vmatprep.subr.mxu0 0.0
    %1031 = vmatpush1.msra.mxu0 %v773
    %1032 = vmatprep.subr.mxu0 0.0
    %1033 = vmatpush1.msra.mxu0 %v774
    %1034 = vmatprep.subr.mxu0 0.0
    %1035 = vmatpush1.msra.mxu0 %v775
    %1036 = vmatprep.subr.mxu0 0.0
    %1037 = vmatpush1.msra.mxu0 %v776
    %1038 = vmatprep.subr.mxu0 0.0
    %1039 = vmatpush1.msra.mxu0 %v777
    %1040 = vmatprep.subr.mxu0 0.0
    %1041 = vmatpush1.msra.mxu0 %v778
    %1042 = vmatprep.mubr.f32.mxu0 %v56
    %1043 = vmatmul.mubr.f32.gmra.mrb[0].mxu0 %v55
    %v1044 = vpop.f32.mrb[0].mxu0
    %v1045 = vadd.f32 %v976, %v1044
    %v1046 = vpop.f32.mrb[0].mxu0
    %1047 = vdwg.mxu0
    %1048 = vmatprep.subr.mxu0 0.0
    %1049 = vmatpush1.msra.mxu0 %v779
    %1050 = vmatprep.subr.mxu0 0.0
    %1051 = vmatpush1.msra.mxu0 %v780
    %1052 = vmatprep.subr.mxu0 0.0
    %1053 = vmatpush1.msra.mxu0 %v781
    %1054 = vmatprep.subr.mxu0 0.0
    %1055 = vmatpush1.msra.mxu0 %v782
    %1056 = vmatprep.subr.mxu0 0.0
    %1057 = vmatpush1.msra.mxu0 %v783
    %1058 = vmatprep.subr.mxu0 0.0
    %1059 = vmatpush1.msra.mxu0 %v784
    %1060 = vmatprep.subr.mxu0 0.0
    %1061 = vmatpush1.msra.mxu0 %v785
    %1062 = vmatprep.subr.mxu0 0.0
    %1063 = vmatpush1.msra.mxu0 %v786
    %1064 = vmatprep.subr.mxu0 0.0
    %1065 = vmatpush1.msra.mxu0 %v787
    %1066 = vmatprep.subr.mxu0 0.0
    %1067 = vmatpush1.msra.mxu0 %v788
    %1068 = vmatprep.subr.mxu0 0.0
    %1069 = vmatpush1.msra.mxu0 %v789
    %1070 = vmatprep.subr.mxu0 0.0
    %1071 = vmatpush1.msra.mxu0 %v790
    %1072 = vmatprep.subr.mxu0 0.0
    %1073 = vmatpush1.msra.mxu0 %v791
    %1074 = vmatprep.subr.mxu0 0.0
    %1075 = vmatpush1.msra.mxu0 %v792
    %1076 = vmatprep.subr.mxu0 0.0
    %1077 = vmatpush1.msra.mxu0 %v793
    %1078 = vmatprep.subr.mxu0 0.0
    %1079 = vmatpush1.msra.mxu0 %v794
    %1080 = vmatprep.subr.mxu0 0.0
    %1081 = vmatpush1.msra.mxu0 %v795
    %1082 = vmatprep.subr.mxu0 0.0
    %1083 = vmatpush1.msra.mxu0 %v796
    %1084 = vmatprep.subr.mxu0 0.0
    %1085 = vmatpush1.msra.mxu0 %v797
    %1086 = vmatprep.subr.mxu0 0.0
    %1087 = vmatpush1.msra.mxu0 %v798
    %1088 = vmatprep.subr.mxu0 0.0
    %1089 = vmatpush1.msra.mxu0 %v799
    %1090 = vmatprep.subr.mxu0 0.0
    %1091 = vmatpush1.msra.mxu0 %v800
    %1092 = vmatprep.subr.mxu0 0.0
    %1093 = vmatpush1.msra.mxu0 %v801
    %1094 = vmatprep.subr.mxu0 0.0
    %1095 = vmatpush1.msra.mxu0 %v802
    %1096 = vmatprep.subr.mxu0 0.0
    %1097 = vmatpush1.msra.mxu0 %v803
    %1098 = vmatprep.subr.mxu0 0.0
    %1099 = vmatpush1.msra.mxu0 %v804
    %1100 = vmatprep.subr.mxu0 0.0
    %1101 = vmatpush1.msra.mxu0 %v805
    %1102 = vmatprep.subr.mxu0 0.0
    %1103 = vmatpush1.msra.mxu0 %v806
    %1104 = vmatprep.subr.mxu0 0.0
    %1105 = vmatpush1.msra.mxu0 %v807
    %1106 = vmatprep.subr.mxu0 0.0
    %1107 = vmatpush1.msra.mxu0 %v808
    %1108 = vmatprep.subr.mxu0 0.0
    %1109 = vmatpush1.msra.mxu0 %v809
    %1110 = vmatprep.subr.mxu0 0.0
    %1111 = vmatpush1.msra.mxu0 %v810
    %1112 = vmatprep.mubr.f32.mxu0 %v58
    %1113 = vmatmul.mubr.f32.gmra.mrb[0].mxu0 %v57
    %v1114 = vpop.f32.mrb[0].mxu0
    %v1115 = vadd.f32 %v1045, %v1114
    %v1116 = vpop.f32.mrb[0].mxu0
    %1117 = vdwg.mxu0
    %1118 = vmatprep.subr.mxu0 0.0
    %1119 = vmatpush1.msra.mxu0 %v811
    %1120 = vmatprep.subr.mxu0 0.0
    %1121 = vmatpush1.msra.mxu0 %v812
    %1122 = vmatprep.subr.mxu0 0.0
    %1123 = vmatpush1.msra.mxu0 %v813
    %1124 = vmatprep.subr.mxu0 0.0
    %1125 = vmatpush1.msra.mxu0 %v814
    %1126 = vmatprep.subr.mxu0 0.0
    %1127 = vmatpush1.msra.mxu0 %v815
    %1128 = vmatprep.subr.mxu0 0.0
    %1129 = vmatpush1.msra.mxu0 %v816
    %1130 = vmatprep.subr.mxu0 0.0
    %1131 = vmatpush1.msra.mxu0 %v817
    %1132 = vmatprep.subr.mxu0 0.0
    %1133 = vmatpush1.msra.mxu0 %v818
    %1134 = vmatprep.subr.mxu0 0.0
    %1135 = vmatpush1.msra.mxu0 %v819
    %1136 = vmatprep.subr.mxu0 0.0
    %1137 = vmatpush1.msra.mxu0 %v820
    %1138 = vmatprep.subr.mxu0 0.0
    %1139 = vmatpush1.msra.mxu0 %v821
    %1140 = vmatprep.subr.mxu0 0.0
    %1141 = vmatpush1.msra.mxu0 %v822
    %1142 = vmatprep.subr.mxu0 0.0
    %1143 = vmatpush1.msra.mxu0 %v823
    %1144 = vmatprep.subr.mxu0 0.0
    %1145 = vmatpush1.msra.mxu0 %v824
    %1146 = vmatprep.subr.mxu0 0.0
    %1147 = vmatpush1.msra.mxu0 %v825
    %1148 = vmatprep.subr.mxu0 0.0
    %1149 = vmatpush1.msra.mxu0 %v826
    %1150 = vmatprep.subr.mxu0 0.0
    %1151 = vmatpush1.msra.mxu0 %v827
    %1152 = vmatprep.subr.mxu0 0.0
    %1153 = vmatpush1.msra.mxu0 %v828
    %1154 = vmatprep.subr.mxu0 0.0
    %1155 = vmatpush1.msra.mxu0 %v829
    %1156 = vmatprep.subr.mxu0 0.0
    %1157 = vmatpush1.msra.mxu0 %v830
    %1158 = vmatprep.subr.mxu0 0.0
    %1159 = vmatpush1.msra.mxu0 %v831
    %1160 = vmatprep.subr.mxu0 0.0
    %1161 = vmatpush1.msra.mxu0 %v832
    %1162 = vmatprep.subr.mxu0 0.0
    %1163 = vmatpush1.msra.mxu0 %v833
    %1164 = vmatprep.subr.mxu0 0.0
    %1165 = vmatpush1.msra.mxu0 %v834
    %1166 = vmatprep.subr.mxu0 0.0
    %1167 = vmatpush1.msra.mxu0 %v835
    %1168 = vmatprep.subr.mxu0 0.0
    %1169 = vmatpush1.msra.mxu0 %v836
    %1170 = vmatprep.subr.mxu0 0.0
    %1171 = vmatpush1.msra.mxu0 %v837
    %1172 = vmatprep.subr.mxu0 0.0
    %1173 = vmatpush1.msra.mxu0 %v838
    %1174 = vmatprep.subr.mxu0 0.0
    %1175 = vmatpush1.msra.mxu0 %v839
    %1176 = vmatprep.subr.mxu0 0.0
    %1177 = vmatpush1.msra.mxu0 %v840
    %1178 = vmatprep.subr.mxu0 0.0
    %1179 = vmatpush1.msra.mxu0 %v841
    %1180 = vmatprep.subr.mxu0 0.0
    %1181 = vmatpush1.msra.mxu0 %v842
    %1182 = vmatprep.mubr.f32.mxu0 %v60
    %1183 = vmatmul.mubr.f32.gmra.mrb[0].mxu0 %v59
    %v1184 = vpop.f32.mrb[0].mxu0
    %v1185 = vadd.f32 %v1115, %v1184
    %v1186 = vpop.f32.mrb[0].mxu0
    %1187 = vdwg.mxu0
    %v1189 = vlaneseq
    %v1190 = vshrl.u32 %v1189, 7
    %v1191 = vsub.s32 0, %v1190
    %v1192 = vrot.slane %v866, %v1191
    %v1195 = vsel %vm385, %v1185, 0
    %1197 = vmatprep.subr.mxu0 0.0
    %1198 = vmatpush1.msra.mxu0 %v859
    %1199 = vmatprep.subr.mxu0 0.0
    %1200 = vmatpush1.msra.mxu0 %v860
    %1201 = vmatprep.subr.mxu0 0.0
    %1202 = vmatpush1.msra.mxu0 %v861
    %1203 = vmatprep.subr.mxu0 0.0
    %1204 = vmatpush1.msra.mxu0 %v862
    %1205 = vmatprep.subr.mxu0 0.0
    %1206 = vmatpush1.msra.mxu0 0.0
    %1207 = vmatprep.subr.mxu0 0.0
    %1208 = vmatpush1.msra.mxu0 0.0
    %1209 = vmatprep.subr.mxu0 0.0
    %1210 = vmatpush1.msra.mxu0 0.0
    %1211 = vmatprep.subr.mxu0 0.0
    %1212 = vmatpush1.msra.mxu0 0.0
    %1213 = vmatprep.subr.mxu0 0.0
    %1214 = vmatpush1.msra.mxu0 0.0
    %1215 = vmatprep.subr.mxu0 0.0
    %1216 = vmatpush1.msra.mxu0 0.0
    %1217 = vmatprep.subr.mxu0 0.0
    %1218 = vmatpush1.msra.mxu0 0.0
    %1219 = vmatprep.subr.mxu0 0.0
    %1220 = vmatpush1.msra.mxu0 0.0
    %1221 = vmatprep.subr.mxu0 0.0
    %1222 = vmatpush1.msra.mxu0 0.0
    %1223 = vmatprep.subr.mxu0 0.0
    %1224 = vmatpush1.msra.mxu0 0.0
    %1225 = vmatprep.subr.mxu0 0.0
    %1226 = vmatpush1.msra.mxu0 0.0
    %1227 = vmatprep.subr.mxu0 0.0
    %1228 = vmatpush1.msra.mxu0 0.0
    %1229 = vmatprep.subr.mxu0 0.0
    %1230 = vmatpush1.msra.mxu0 0.0
    %1231 = vmatprep.subr.mxu0 0.0
    %1232 = vmatpush1.msra.mxu0 0.0
    %1233 = vmatprep.subr.mxu0 0.0
    %1234 = vmatpush1.msra.mxu0 0.0
    %1235 = vmatprep.subr.mxu0 0.0
    %1236 = vmatpush1.msra.mxu0 0.0
    %1237 = vmatprep.subr.mxu0 0.0
    %1238 = vmatpush1.msra.mxu0 0.0
    %1239 = vmatprep.subr.mxu0 0.0
    %1240 = vmatpush1.msra.mxu0 0.0
    %1241 = vmatprep.subr.mxu0 0.0
    %1242 = vmatpush1.msra.mxu0 0.0
    %1243 = vmatprep.subr.mxu0 0.0
    %1244 = vmatpush1.msra.mxu0 0.0
    %1245 = vmatprep.subr.mxu0 0.0
    %1246 = vmatpush1.msra.mxu0 0.0
    %1247 = vmatprep.subr.mxu0 0.0
    %1248 = vmatpush1.msra.mxu0 0.0
    %1249 = vmatprep.subr.mxu0 0.0
    %1250 = vmatpush1.msra.mxu0 0.0
    %1251 = vmatprep.subr.mxu0 0.0
    %1252 = vmatpush1.msra.mxu0 0.0
    %1253 = vmatprep.subr.mxu0 0.0
    %1254 = vmatpush1.msra.mxu0 0.0
    %1255 = vmatprep.subr.mxu0 0.0
    %1256 = vmatpush1.msra.mxu0 0.0
    %1257 = vmatprep.subr.mxu0 0.0
    %1258 = vmatpush1.msra.mxu0 0.0
    %1259 = vmatprep.subr.mxu0 0.0
    %1260 = vmatpush1.msra.mxu0 0.0
    %1261 = vmatprep.mubr.f32.mxu0 0.0
    %1262 = vmatmul.mubr.f32.gmra.mrb[0].mxu0 %v1195
    %v1263 = vpop.f32.mrb[0].mxu0
    %v1264 = vadd.f32 %v1192, %v1263
    %v1265 = vpop.f32.mrb[0].mxu0
    %1266 = vdwg.mxu0
    %vm1267 = vcmask 58368
    %v1268 = vsel %vm1267, %v456, -inf
    %1269 = vmax.xlane.f32.xlu0 %v1268
    %v1270 = vpop.xlane.xlu0 %1269
    %v1271 = vlaneseq
    %v1272 = vand.u32 %v1271, 127
    %v1273 = vcvt.s32.f32 %v1272
    %vm1274 = vcmp.ge.f32.partialorder %v456, %v1270
    %v1275 = vsel %vm1274, %v1273, 8.0
    %v1276 = vsel %vm1267, %v1275, inf
    %1277 = vmin.xlane.f32.xlu0 %v1276
    %v1278 = vpop.xlane.xlu0 %1277
    %v1279 = vcvt.f32.s32.to.zero.pseudo %v1278
    %vm1280 = vcmask 1024
    %1281 = vst.msk [vmem:[%s14] sm:$0x3] %vm1280, %v1279
    %v1282 = vmul.f32 %v376, %v376
    %vm1283 = vcmask 257026
    %v1284 = vsel %vm1283, %v1282, 0.0
    %1285 = vadd.xlane.f32.xlu0 %v1284
    %v1286 = vpop.xlane.xlu0 %1285
    %v1287 = vmax.f32 %v1286, 1e-24
    %v1288 = vrsqrt.pop %v1287
    %v1289 = vmul.f32 %v376, %v1288
    %v1290 = vmul.f32 %v1185, %v1185
    %vm1291 = vcmask 259076
    %v1292 = vsel %vm1291, %v1290, 0.0
    %1293 = vadd.xlane.f32.xlu0 %v1292
    %v1294 = vpop.xlane.xlu0 %1293
    %v1295 = vmax.f32 %v1294, 1e-24
    %v1296 = vrsqrt.pop %v1295
    %v1297 = vmul.f32 %v1185, %v1296
    %1298 = vst.msk [vmem:[%s13 - $0x4] sm:$0x30] %vm1291, %v1297
    %v1300 = vrot.slane %v1297, 2
    %v1302 = vmul.f32 %v1289, %v1300
    %v1303 = vsel %vm1283, %v1302, 0.0
    %1304 = vadd.xlane.f32.xlu0 %v1303
    %v1305 = vpop.xlane.xlu0 %1304
    %v1306 = vmul.f32 %v1305, 14.285714
    %v1307 = vld [vmem:[%s9] sm:$0xff]
    %v1308 = vld [vmem:[%s9 + $0x8] sm:$0xff]
    %v1309 = vld [vmem:[%s9 + $0x10] sm:$0xff]
    %v1310 = vld [vmem:[%s9 + $0x18] sm:$0xff]
    %v1312 = vrot.slane %v1289, 2
    %v1313 = vsel %vm385, %v1312, 0
    %1315 = vmatprep.subr.mxu0 0.0
    %1316 = vmatpush1.msra.mxu0 %v1307
    %1317 = vmatprep.subr.mxu0 0.0
    %1318 = vmatpush1.msra.mxu0 %v1308
    %1319 = vmatprep.subr.mxu0 0.0
    %1320 = vmatpush1.msra.mxu0 %v1309
    %1321 = vmatprep.subr.mxu0 0.0
    %1322 = vmatpush1.msra.mxu0 %v1310
    %1323 = vmatprep.subr.mxu0 0.0
    %1324 = vmatpush1.msra.mxu0 0.0
    %1325 = vmatprep.subr.mxu0 0.0
    %1326 = vmatpush1.msra.mxu0 0.0
    %1327 = vmatprep.subr.mxu0 0.0
    %1328 = vmatpush1.msra.mxu0 0.0
    %1329 = vmatprep.subr.mxu0 0.0
    %1330 = vmatpush1.msra.mxu0 0.0
    %1331 = vmatprep.subr.mxu0 0.0
    %1332 = vmatpush1.msra.mxu0 0.0
    %1333 = vmatprep.subr.mxu0 0.0
    %1334 = vmatpush1.msra.mxu0 0.0
    %1335 = vmatprep.subr.mxu0 0.0
    %1336 = vmatpush1.msra.mxu0 0.0
    %1337 = vmatprep.subr.mxu0 0.0
    %1338 = vmatpush1.msra.mxu0 0.0
    %1339 = vmatprep.subr.mxu0 0.0
    %1340 = vmatpush1.msra.mxu0 0.0
    %1341 = vmatprep.subr.mxu0 0.0
    %1342 = vmatpush1.msra.mxu0 0.0
    %1343 = vmatprep.subr.mxu0 0.0
    %1344 = vmatpush1.msra.mxu0 0.0
    %1345 = vmatprep.subr.mxu0 0.0
    %1346 = vmatpush1.msra.mxu0 0.0
    %1347 = vmatprep.subr.mxu0 0.0
    %1348 = vmatpush1.msra.mxu0 0.0
    %1349 = vmatprep.subr.mxu0 0.0
    %1350 = vmatpush1.msra.mxu0 0.0
    %1351 = vmatprep.subr.mxu0 0.0
    %1352 = vmatpush1.msra.mxu0 0.0
    %1353 = vmatprep.subr.mxu0 0.0
    %1354 = vmatpush1.msra.mxu0 0.0
    %1355 = vmatprep.subr.mxu0 0.0
    %1356 = vmatpush1.msra.mxu0 0.0
    %1357 = vmatprep.subr.mxu0 0.0
    %1358 = vmatpush1.msra.mxu0 0.0
    %1359 = vmatprep.subr.mxu0 0.0
    %1360 = vmatpush1.msra.mxu0 0.0
    %1361 = vmatprep.subr.mxu0 0.0
    %1362 = vmatpush1.msra.mxu0 0.0
    %1363 = vmatprep.subr.mxu0 0.0
    %1364 = vmatpush1.msra.mxu0 0.0
    %1365 = vmatprep.subr.mxu0 0.0
    %1366 = vmatpush1.msra.mxu0 0.0
    %1367 = vmatprep.subr.mxu0 0.0
    %1368 = vmatpush1.msra.mxu0 0.0
    %1369 = vmatprep.subr.mxu0 0.0
    %1370 = vmatpush1.msra.mxu0 0.0
    %1371 = vmatprep.subr.mxu0 0.0
    %1372 = vmatpush1.msra.mxu0 0.0
    %1373 = vmatprep.subr.mxu0 0.0
    %1374 = vmatpush1.msra.mxu0 0.0
    %1375 = vmatprep.subr.mxu0 0.0
    %1376 = vmatpush1.msra.mxu0 0.0
    %1377 = vmatprep.subr.mxu0 0.0
    %1378 = vmatpush1.msra.mxu0 0.0
    %1379 = vmatprep.mubr.f32.mxu0 0.0
    %1380 = vmatmul.mubr.f32.gmra.mrb[0].mxu0 %v1313
    %v1381 = vpop.f32.mrb[0].mxu0
    %v1382 = vadd.f32 0.0, %v1381
    %v1383 = vpop.f32.mrb[0].mxu0
    %1384 = vdwg.mxu0
    %v1385 = vmul.f32 %v1382, 14.285714
    %v1386 = vld [vmem:[%s11] sm:$0x3]
    %v1387 = vcvt.s32.f32 %v1386
    %1389 = vset.pattern.permute.xlu0 0
    %1390 = vperm.xlu0 %1389, %v1387
    %v1391 = vpop.permute.xlu0 %1390
    %vm1393 = vcmp.eq.f32.partialorder %v1273, %v1391
    %v1394 = vsel %vm1393, 1.0, 0.0
    %vm1395 = vcmask 123904
    %v1396 = vsel %vm1395, %v1394, 0.0
    %v1397 = vrot.slane %v1396, 4
    %v1398 = vadd.f32 %v1396, %v1397
    %v1399 = vrot.slane %v1398, 2
    %v1400 = vadd.f32 %v1398, %v1399
    %v1401 = vrot.slane %v1400, 1
    %v1402 = vadd.f32 %v1400, %v1401
    %v1403 = vsel %vm1393, %v1278, 0.0
    %v1404 = vsel %vm1395, %v1403, 0.0
    %v1405 = vrot.slane %v1404, 4
    %v1406 = vadd.f32 %v1404, %v1405
    %v1407 = vrot.slane %v1406, 2
    %v1408 = vadd.f32 %v1406, %v1407
    %v1409 = vrot.slane %v1408, 1
    %v1410 = vadd.f32 %v1408, %v1409
    %v1411 = vld [vmem:[%s10] sm:$0x1]
    %v1412 = vcvt.s32.f32 %v1411
    %vm1413 = vcmp.gt.f32.partialorder %v1402, 0.5
    %v1414 = vsel %vm1413, %v1410, %v1412
    %v1415 = vsub.f32 %v456, %v1270
    %v1416 = vmul.f32 %v1415, 1.442695
    %v1417 = vpow.pop %v1416
    %v1418 = vsel %vm1267, %v1417, 0.0
    %1419 = vadd.xlane.f32.xlu0 %v1418
    %v1420 = vpop.xlane.xlu0 %1419
    %v1421 = vlog2.pop %v1420
    %v1422 = vmul.f32 %v1421, 0.6931472
    %v1423 = vadd.f32 %v1270, %v1422
    %vm1424 = vcmp.eq.f32.partialorder %v1273, %v1278
    %v1425 = vsel %vm1424, %v456, 0.0
    %v1426 = vsel %vm1267, %v1425, 0.0
    %1427 = vadd.xlane.f32.xlu0 %v1426
    %v1428 = vpop.xlane.xlu0 %1427
    %v1429 = vsub.f32 %v1423, %v1428
    %v1430 = vsel %vm1280, %v1429, 0.0
    %1431 = vadd.xlane.f32.xlu0 %v1430
    %v1432 = vpop.xlane.xlu0 %1431
    %v1433 = vrot.slane %v1432, 4
    %v1434 = vadd.f32 %v1432, %v1433
    %v1435 = vrot.slane %v1434, 2
    %v1436 = vadd.f32 %v1434, %v1435
    %v1437 = vrot.slane %v1436, 1
    %v1438 = vadd.f32 %v1436, %v1437
    %s1439 = vtos %v1438
    %s1440 = smul.f32 %s1439, 0.5
    %v1441 = vlaneseq
    %v1442 = vshrl.u32 %v1441, 7
    %v1443 = vsub.s32 0, %v1442
    %v1444 = vrot.slane %v1414, %v1443
    %vm1445 = vcmp.ne.f32.partialorder %v1278, %v1444
    %v1446 = vsel %vm1445, %v1385, -inf
    %v1447 = vsel %vm1395, %v1446, -inf
    %1448 = vmax.xlane.f32.xlu0 %v1447
    %v1449 = vpop.xlane.xlu0 %1448
    %v1451 = vrot.slane %v1449, 6
    %v1453 = vmax.f32 %v1306, %v1451
    %v1454 = vsub.f32 %v1306, %v1453
    %v1455 = vmul.f32 %v1454, 1.442695
    %v1456 = vpow.pop %v1455
    %1458 = vset.pattern.permute.xlu0 0
    %1459 = vperm.xlu0 %1458, %v1453
    %v1460 = vpop.permute.xlu0 %1459
    %v1461 = vrot.slane %v1460, 2
    %v1463 = vsub.f32 %v1446, %v1461
    %v1464 = vmul.f32 %v1463, 1.442695
    %v1465 = vpow.pop %v1464
    %v1466 = vsel %vm1395, %v1465, 0.0
    %1467 = vadd.xlane.f32.xlu0 %v1466
    %v1468 = vpop.xlane.xlu0 %1467
    %v1470 = vrot.slane %v1468, 6
    %v1472 = vadd.f32 %v1456, %v1470
    %v1473 = vlog2.pop %v1472
    %v1474 = vmul.f32 %v1473, 0.6931472
    %v1475 = vadd.f32 %v1453, %v1474
    %v1476 = vsub.f32 %v1475, %v1306
    %v1478 = vrot.slane %v1476, 2
    %v1480 = vsel %vm1280, %v1478, 0.0
    %1481 = vadd.xlane.f32.xlu0 %v1480
    %v1482 = vpop.xlane.xlu0 %1481
    %v1483 = vrot.slane %v1482, 4
    %v1484 = vadd.f32 %v1482, %v1483
    %v1485 = vrot.slane %v1484, 2
    %v1486 = vadd.f32 %v1484, %v1485
    %v1487 = vrot.slane %v1486, 1
    %v1488 = vadd.f32 %v1486, %v1487
    %s1489 = vtos %v1488
    %s1490 = smul.f32 %s1489, 0.5
    %v1491 = vsub.f32 %v456, %v1423
    %v1492 = vmul.f32 %v1491, 1.442695
    %v1493 = vpow.pop %v1492
    %v1494 = vsel %vm1267, %v1493, 0.0
    %v1495 = vrot.slane %v1494, 4
    %v1496 = vadd.f32 %v1494, %v1495
    %v1497 = vrot.slane %v1496, 2
    %v1498 = vadd.f32 %v1496, %v1497
    %v1499 = vrot.slane %v1498, 1
    %v1500 = vadd.f32 %v1498, %v1499
    %v1501 = vmul.f32 %v1500, 0.5
    %v1502 = vadd.f32 %v1501, 1e-08
    %v1503 = vlog2.pop %v1502
    %v1504 = vmul.f32 %v1503, 0.6931472
    %v1505 = vmul.f32 %v1501, %v1504
    %v1506 = vsel %vm970, %v1505, 0.0
    %1507 = vadd.xlane.f32.xlu0 %v1506
    %v1508 = vpop.xlane.xlu0 %1507
    %v1509 = vrot.slane %v1508, 4
    %v1510 = vadd.f32 %v1508, %v1509
    %v1511 = vrot.slane %v1510, 2
    %v1512 = vadd.f32 %v1510, %v1511
    %v1513 = vrot.slane %v1512, 1
    %v1514 = vadd.f32 %v1512, %v1513
    %s1515 = vtos %v1514
    %s1516 = scalar_lea.smem [#allocation8], 0
    %1517 = sst [smem:[%s1516]] %s1440
    %s1518 = scalar_lea.smem [#allocation8], 1
    %1519 = sst [smem:[%s1518]] %s1490
    %s1520 = scalar_lea.smem [#allocation8], 2
    %1521 = sst [smem:[%s1520]] %s1515
    %s1522 = sadd.f32 %s1440, %s1490
    %s1523 = sadd.f32 %s1522, %s1515
    %s1524 = scalar_lea.smem [#allocation8], 3
    %1525 = sst [smem:[%s1524]] %s1523
    %vm1526 = vcmask 60418
    %1527 = vst.msk [vmem:[#allocation2 - $0x2] sm:$0xc] %vm1526, %v456
    %vm1528 = vcmask 254976
    %1529 = vst.msk [vmem:[#allocation5] sm:$0x3] %vm1528, %v1185
    %v1530 = vsel %vm1267, %v1264, -inf
    %1531 = vmax.xlane.f32.xlu0 %v1530
    %v1532 = vpop.xlane.xlu0 %1531
    %v1533 = vsub.f32 %v1264, %v1532
    %v1534 = vmul.f32 %v1533, 1.442695
    %v1535 = vpow.pop %v1534
    %v1536 = vsel %vm1267, %v1535, 0.0
    %1537 = vadd.xlane.f32.xlu0 %v1536
    %v1538 = vpop.xlane.xlu0 %1537
    %v1539 = vlog2.pop %v1538
    %v1540 = vmul.f32 %v1539, 0.6931472
    %v1541 = vadd.f32 %v1532, %v1540
    %v1542 = vsub.f32 %v1264, %v1541
    %v1543 = vmul.f32 %v1542, 1.442695
    %v1544 = vpow.pop %v1543
    %1545 = vst.msk [vmem:[#allocation7] sm:$0x3] %vm1267, %v1544
    // Predicated region
    $region50: #{_adapt_step.1} parent=1 // pred_check
      _
    $region51: #{_adapt_step.1} parent=1 // pred_check_branch
      %1547 = sbr.rel (0) target = $region53
    $region52: #{_adapt_step.1} parent=1 // pred_region
      %s1549 = ssub.s32 32, 32
      %1550 = vsyncadd [#allocation3], %s1549
      %s1552 = sshll.u32 [#allocation2], 4
      %s1553 = int_to_ptr.vmem [resolvable:$true] %s1552
      %1555 = dma.vmem_to_hbm [thread:$0]  %s1553, 32, %s12, [#allocation3]
    $region53: #{_adapt_step.1} parent=1 // pred_fallthru
      _
    // Predicated region
    $region54: #{_adapt_step.1} parent=1 // pred_check
      _
    $region55: #{_adapt_step.1} parent=1 // pred_check_branch
      %1557 = sbr.rel (0) target = $region57
    $region56: #{_adapt_step.1} parent=1 // pred_region
      _
    $region57: #{_adapt_step.1} parent=1 // pred_fallthru
      _
    // Predicated region
    $region58: #{_adapt_step.1} parent=1 // pred_check
      _
    $region59: #{_adapt_step.1} parent=1 // pred_check_branch
      %1559 = sbr.rel (0) target = $region61
    $region60: #{_adapt_step.1} parent=1 // pred_region
      _
    $region61: #{_adapt_step.1} parent=1 // pred_fallthru
      _
    // Predicated region
    $region62: #{_adapt_step.1} parent=1 // pred_check
      _
    $region63: #{_adapt_step.1} parent=1 // pred_check_branch
      %1561 = sbr.rel (0) target = $region65
    $region64: #{_adapt_step.1} parent=1 // pred_region
      %s1563 = ssub.s32 32, 32
      %1564 = vsyncadd [#allocation6], %s1563
      %s1566 = sshll.u32 [#allocation5], 4
      %s1567 = int_to_ptr.vmem [resolvable:$true] %s1566
      %1569 = dma.vmem_to_hbm [thread:$0]  %s1567, 32, %s15, [#allocation6]
    $region65: #{_adapt_step.1} parent=1 // pred_fallthru
      _
    // Predicated region
    $region66: #{_adapt_step.1} parent=1 // pred_check
      _
    $region67: #{_adapt_step.1} parent=1 // pred_check_branch
      %1571 = sbr.rel (0) target = $region69
    $region68: #{_adapt_step.1} parent=1 // pred_region
      %s1573 = ssub.s32 32, 32
      %1574 = vsyncadd [#allocation6], %s1573
      %s1576 = sshll.u32 [#allocation7], 4
      %s1577 = int_to_ptr.vmem [resolvable:$true] %s1576
      %1579 = dma.vmem_to_hbm [thread:$0]  %s1577, 32, %s16, [#allocation6]
    $region69: #{_adapt_step.1} parent=1 // pred_fallthru
      _
    // Predicated region
    $region70: #{_adapt_step.1} parent=1 // pred_check
      _
    $region71: #{_adapt_step.1} parent=1 // pred_check_branch
      %1581 = sbr.rel (0) target = $region73
    $region72: #{_adapt_step.1} parent=1 // pred_region
      %s1583 = ssub.s32 16, 16
      %1584 = vsyncadd [#allocation4], %s1583
      %1587 = dma.smem_to_hbm [#allocation8], 16, %s17, [#allocation4]
    $region73: #{_adapt_step.1} parent=1 // pred_fallthru
      _
    // Predicated region
    $region74: #{_adapt_step.1} parent=1 // pred_check
      _
    $region75: #{_adapt_step.1} parent=1 // pred_check_branch
      %1589 = sbr.rel (0) target = $region77
    $region76: #{_adapt_step.1} parent=1 // pred_region
      _
    $region77: #{_adapt_step.1} parent=1 // pred_fallthru
      _
    // Predicated region
    $region78: #{_adapt_step.1} parent=1 // pred_check
      _
    $region79: #{_adapt_step.1} parent=1 // pred_check_branch
      %1591 = sbr.rel (0) target = $region81
    $region80: #{_adapt_step.1} parent=1 // pred_region
      %s1593 = ssub.s32 16, 16
      %1594 = vsyncadd [#allocation10], %s1593
      %s1596 = sshll.u32 [#allocation9], 4
      %s1597 = int_to_ptr.vmem [resolvable:$true] %s1596
      %1599 = dma.vmem_to_hbm [thread:$0]  %s1597, 16, %s19, [#allocation10]
    $region81: #{_adapt_step.1} parent=1 // pred_fallthru
      _
    // Predicated region
    $region82: #{_adapt_step.1} parent=1 // pred_check
      _
    $region83: #{_adapt_step.1} parent=1 // pred_check_branch
      %1601 = sbr.rel (0) target = $region85
    $region84: #{_adapt_step.1} parent=1 // pred_region
      _
    $region85: #{_adapt_step.1} parent=1 // pred_fallthru
      _
    // Predicated region
    $region86: #{_adapt_step.1} parent=1 // pred_check
      _
    $region87: #{_adapt_step.1} parent=1 // pred_check_branch
      %1603 = sbr.rel (0) target = $region89
    $region88: #{_adapt_step.1} parent=1 // pred_region
      %s1605 = ssub.s32 16, 16
      %1606 = vsyncadd [#allocation10], %s1605
      %s1608 = sshll.u32 [#allocation11], 4
      %s1609 = int_to_ptr.vmem [resolvable:$true] %s1608
      %1611 = dma.vmem_to_hbm [thread:$0]  %s1609, 16, %s21, [#allocation10]
    $region89: #{_adapt_step.1} parent=1 // pred_fallthru
      _
    // Predicated region
    $region90: #{_adapt_step.1} parent=1 // pred_check
      _
    $region91: #{_adapt_step.1} parent=1 // pred_check_branch
      %1613 = sbr.rel (0) target = $region93
    $region92: #{_adapt_step.1} parent=1 // pred_region
      %1614 = dma.done [#allocation3], 32
    $region93: #{_adapt_step.1} parent=1 // pred_fallthru
      _
    // Predicated region
    $region94: #{_adapt_step.1} parent=1 // pred_check
      _
    $region95: #{_adapt_step.1} parent=1 // pred_check_branch
      %1616 = sbr.rel (0) target = $region97
    $region96: #{_adapt_step.1} parent=1 // pred_region
      _
    $region97: #{_adapt_step.1} parent=1 // pred_fallthru
      _
    // Predicated region
    $region98: #{_adapt_step.1} parent=1 // pred_check
      _
    $region99: #{_adapt_step.1} parent=1 // pred_check_branch
      %1618 = sbr.rel (0) target = $region101
    $region100: #{_adapt_step.1} parent=1 // pred_region
      _
    $region101: #{_adapt_step.1} parent=1 // pred_fallthru
      _
    // Predicated region
    $region102: #{_adapt_step.1} parent=1 // pred_check
      _
    $region103: #{_adapt_step.1} parent=1 // pred_check_branch
      %1620 = sbr.rel (0) target = $region105
    $region104: #{_adapt_step.1} parent=1 // pred_region
      %1621 = dma.done [#allocation6], 32
    $region105: #{_adapt_step.1} parent=1 // pred_fallthru
      _
    // Predicated region
    $region106: #{_adapt_step.1} parent=1 // pred_check
      _
    $region107: #{_adapt_step.1} parent=1 // pred_check_branch
      %1623 = sbr.rel (0) target = $region109
    $region108: #{_adapt_step.1} parent=1 // pred_region
      %1624 = dma.done [#allocation6], 32
    $region109: #{_adapt_step.1} parent=1 // pred_fallthru
      _
    // Predicated region
    $region110: #{_adapt_step.1} parent=1 // pred_check
      _
    $region111: #{_adapt_step.1} parent=1 // pred_check_branch
      %1626 = sbr.rel (0) target = $region113
    $region112: #{_adapt_step.1} parent=1 // pred_region
      %1627 = dma.done [#allocation4], 16
    $region113: #{_adapt_step.1} parent=1 // pred_fallthru
      _
    // Predicated region
    $region114: #{_adapt_step.1} parent=1 // pred_check
      _
    $region115: #{_adapt_step.1} parent=1 // pred_check_branch
      %1629 = sbr.rel (0) target = $region117
    $region116: #{_adapt_step.1} parent=1 // pred_region
      _
    $region117: #{_adapt_step.1} parent=1 // pred_fallthru
      _
    // Predicated region
    $region118: #{_adapt_step.1} parent=1 // pred_check
      _
    $region119: #{_adapt_step.1} parent=1 // pred_check_branch
      %1631 = sbr.rel (0) target = $region121
    $region120: #{_adapt_step.1} parent=1 // pred_region
      %1632 = dma.done [#allocation10], 16
    $region121: #{_adapt_step.1} parent=1 // pred_fallthru
      _
    // Predicated region
    $region122: #{_adapt_step.1} parent=1 // pred_check
      _
    $region123: #{_adapt_step.1} parent=1 // pred_check_branch
      %1634 = sbr.rel (0) target = $region125
    $region124: #{_adapt_step.1} parent=1 // pred_region
      _
    $region125: #{_adapt_step.1} parent=1 // pred_fallthru
      _
    // Predicated region
    $region126: #{_adapt_step.1} parent=1 // pred_check
      _
    $region127: #{_adapt_step.1} parent=1 // pred_check_branch
      %1636 = sbr.rel (0) target = $region129
    $region128: #{_adapt_step.1} parent=1 // pred_region
      %1637 = dma.done [#allocation10], 16
    $region129: #{_adapt_step.1} parent=1 // pred_fallthru
      _
    %1638 = sfence
    %1639 = vsyncpa [#allocation3], 1
    %1640 = vsyncpa [#allocation6], 1
    %1641 = vsyncpa [#allocation10], 1
    %1642 = vsyncpa [#allocation4], 1

</llo_original>
